<compile_context>
chip_gen: v5e
topology: v5e:2x2
jax: 0.10.0
libtpu: 0.0.40
codegen_flags: <defaults>
</compile_context>

<pallas_src>
import functools

import jax
import jax.numpy as jnp
import numpy as np
from jax import lax
from jax.experimental import pallas as pl
from jax.experimental.pallas import tpu as pltpu


_LANE = 128            # inner lane-chunk size (keeps live vregs ~30 << 64)
_MAX_TILE_GROUPS = 32  # up to 32*128 = 4096 lanes of (batch*node) per grid step


def _round_up(a, b):
    return ((a + b - 1) // b) * b


# ------------------------------ Pallas kernel -------------------------------


def layer_block_kernel(x_ref, w1_ref, b1_ref, wk_ref, bk_ref, o_ref, *,
                       c_in, c_out, k, T_pad, t1, tp, tp_pad, tail_start):
    # x_ref : (c_in*T_pad, m_tile)   VMEM  row ci*T_pad + t == input[ci, t, lane]
    # w1_ref: (c_out, c_in)          SMEM  1x1 / stride-2 conv weights
    # b1_ref: (c_out,)               SMEM
    # wk_ref: (c_out, c_in*k)        SMEM  1xk / stride-1 conv weights
    # bk_ref: (c_out,)               SMEM
    # o_ref : (c_out*tp_pad, m_tile) VMEM  row co*tp_pad + t == out[co, t, lane]
    m_tile = x_ref.shape[-1]
    n_chunks = m_tile // _LANE
    span = 2 * tp - 1              # contiguous rows covering the stride-2 tail
    pad_rows = tp_pad - tp
    zero_pad = (jnp.zeros((pad_rows, _LANE), jnp.float32)
                if pad_rows else None)   # hoisted: built once per grid step

    # Static 128-lane chunk loop over the DMA'd tile: bounds register pressure
    # regardless of how large m_tile is, so big tiles and hoisted windows can
    # coexist without spills.
    for c in range(n_chunks):
        lanes = pl.ds(c * _LANE, _LANE)

        # ---- 1xk "valid" conv along time ----------------------------------
        # Each window is loaded exactly once and updates all c_out
        # accumulators; bias is fused into the first FMA.
        acc = [None] * c_out
        for ci in range(c_in):
            for dk in range(k):
                win = x_ref[pl.ds(ci * T_pad + dk, t1), lanes]
                for co in range(c_out):
                    w = wk_ref[co, ci * k + dk]
                    acc[co] = (w * win + bk_ref[co]) if acc[co] is None \
                        else acc[co] + w * win

        # ---- 1x1 / stride-2 conv on the tail rows (residual branch) --------
        # One contiguous span load per input channel; the stride-2 subsample
        # happens once per channel via static row slices, all in registers.
        res = [None] * c_out
        for ci in range(c_in):
            sp = x_ref[pl.ds(ci * T_pad + tail_start, span), lanes]
            tail = sp[0:1] if tp == 1 else jnp.concatenate(
                [sp[2 * j:2 * j + 1] for j in range(tp)], axis=0)
            for co in range(c_out):
                w = w1_ref[co, ci]
                res[co] = (w * tail + b1_ref[co]) if res[co] is None \
                    else res[co] + w * tail

        # ---- maxpool (1,3) stride (1,2) + residual add + ReLU ---------------
        # Pairwise max of shifted views, stride-2 subsample on the value (no
        # VMEM scratch round trip), then a full-8-row aligned lane-dense store.
        for co in range(c_out):
            a = acc[co]
            m = jnp.maximum(jnp.maximum(a[0:t1 - 2], a[1:t1 - 1]), a[2:t1])
            pool = m[0:1] if tp == 1 else jnp.concatenate(
                [m[2 * t:2 * t + 1] for t in range(tp)], axis=0)
            out = jnp.maximum(pool + res[co], 0.0)
            if zero_pad is not None:
                out = jnp.concatenate([out, zero_pad], axis=0)
            o_ref[pl.ds(co * tp_pad, tp_pad), lanes] = out.astype(o_ref.dtype)


# ------------------------------ Pallas wrapper -------------------------------


def layer_block_forward(x_nchw, w1, b1, wk, bk):
    """Forward of MAGNN layer_block.

    x_nchw : (B, c_in, num_nodes, T)                (PyTorch NCHW)
    w1, b1 : conv (1,1), stride (1,2)   w1: (c_out, c_in, 1, 1), b1: (c_out,)
    wk, bk : conv (1,k), stride (1,1)   wk: (c_out, c_in, 1, k), bk: (c_out,)
    returns (B, c_out, num_nodes, Tp) =
        relu(maxpool_{1x3,/2}(conv1xk(x)) + conv1x1_{/2}(x)[..., -Tp:])
    """
    B, c_in, N, T = x_nchw.shape
    c_out, _, _, k = wk.shape
    t2 = (T - 1) // 2 + 1            # stride-2 1x1 conv output length
    t1 = T - k + 1                   # valid 1xk conv output length
    assert t1 >= 3, "layer_block needs T >= k + 2 for the (1,3) maxpool"
    tp = (t1 - 3) // 2 + 1           # maxpool (1,3)/2 valid output length
    assert tp >= 1 and t2 >= tp
    tail_start = 2 * (t2 - tp)       # first input time used by residual branch
    tp_pad = _round_up(tp, 8)        # 8-aligned per-channel output time stride
    T_pad = _round_up(T, 8)          # keep each channel's row base 8-aligned

    # Lane-dense tiling of the flattened (batch*node) axis.  Big tiles
    # amortize the ~0.35us per-grid-step overhead; keep >= 2 grid steps when
    # there is enough work so both v7x TensorCores get a share.
    M = B * N
    lane_groups = (M + _LANE - 1) // _LANE
    if lane_groups <= 1:
        tile_groups = 1
    else:
        tile_groups = max(1, min(_MAX_TILE_GROUPS, lane_groups // 2))
    m_tile = _LANE * tile_groups
    m_pad = _round_up(M, m_tile)
    grid = m_pad // m_tile

    # NCHW -> (c_in*T_pad, m_pad): channel*time on sublanes, batch*node on
    # lanes.  NOTE: this transpose/pad (and the inverse below) are separate
    # XLA ops with their own HBM round trips; stacked layer_blocks should keep
    # activations in this lane-dense layout instead of converting every call.
    x = jnp.transpose(x_nchw, (1, 3, 0, 2)).reshape(c_in, T, M)
    if T_pad != T or m_pad != M:
        x = jnp.pad(x, ((0, 0), (0, T_pad - T), (0, m_pad - M)))
    x = x.reshape(c_in * T_pad, m_pad)

    w1_flat = w1[:, :, 0, 0]                            # (c_out, c_in)
    wk_flat = wk[:, :, 0, :].reshape(c_out, c_in * k)   # (c_out, c_in*k)

    kern = functools.partial(layer_block_kernel, c_in=c_in, c_out=c_out, k=k,
                             T_pad=T_pad, t1=t1, tp=tp, tp_pad=tp_pad,
                             tail_start=tail_start)
    smem = pl.BlockSpec(memory_space=pltpu.MemorySpace.SMEM)

    out = pl.pallas_call(
        kern,
        out_shape=jax.ShapeDtypeStruct((c_out * tp_pad, m_pad), x.dtype),
        grid=(grid,),
        in_specs=[
            pl.BlockSpec((c_in * T_pad, m_tile), lambda i: (0, i)),
            smem,   # w1
            smem,   # b1
            smem,   # wk
            smem,   # bk
        ],
        out_specs=pl.BlockSpec((c_out * tp_pad, m_tile), lambda i: (0, i)),
        compiler_params=pltpu.CompilerParams(
            dimension_semantics=("parallel",)),
    )(x, w1_flat, b1, wk_flat, bk)

    # (c_out*tp_pad, m_pad) -> NCHW (B, c_out, N, tp); drop lane + time padding.
    out = out[:, :M].reshape(c_out, tp_pad, B, N)[:, :tp]
    # TODO(synk): the padded conv/pool layers created first in the PyTorch
    # __init__ are overwritten before use (dead code); only the final "valid"
    # conv1xk / maxpool definitions are implemented.
    return jnp.transpose(out, (2, 0, 3, 1))


# ------------------------------ JAX reference --------------------------------


def _ref_layer_block(x, w1, b1, wk, bk):
    def conv(x, w, b, stride_w):
        out = lax.conv_general_dilated(
            x, w, window_strides=(1, stride_w), padding="VALID",
            dimension_numbers=("NCHW", "OIHW", "NCHW"))
        return out + b[None, :, None, None]

    conv_output = conv(x, w1, b1, 2)
    conv_output1 = conv(x, wk, bk, 1)
    pooled = lax.reduce_window(
        conv_output1, -jnp.inf, lax.max,
        window_dimensions=(1, 1, 1, 3), window_strides=(1, 1, 1, 2),
        padding="VALID")
    tail = conv_output[..., -pooled.shape[3]:]
    return jnp.maximum(pooled + tail, 0.0)


# ----------------------------------- main ------------------------------------


if __name__ == "__main__":
    B, c_in, c_out = 2, 4, 8
    num_nodes, seq_len = 16, 16
    k_size = 3

    key = jax.random.PRNGKey(0)
    kx, kw1, kb1, kwk, kbk = jax.random.split(key, 5)

    x = jax.random.normal(kx, (B, c_in, num_nodes, seq_len), jnp.float32)
    w1 = jax.random.normal(kw1, (c_out, c_in, 1, 1), jnp.float32) * 0.1
    b1 = jax.random.normal(kb1, (c_out,), jnp.float32) * 0.1
    wk = jax.random.normal(kwk, (c_out, c_in, 1, k_size), jnp.float32) * 0.1
    bk = jax.random.normal(kbk, (c_out,), jnp.float32) * 0.1

    fwd = jax.jit(layer_block_forward)
    out = jax.block_until_ready(fwd(x, w1, b1, wk, bk))
    ref = jax.block_until_ready(_ref_layer_block(x, w1, b1, wk, bk))

    assert out.shape == ref.shape, (out.shape, ref.shape)
    np.testing.assert_allclose(np.asarray(out), np.asarray(ref),
                               rtol=1e-4, atol=1e-4)
    print("KERNEL_OK")
</pallas_src>

<mosaic_0001>
module attributes {stable_mosaic.version = 11 : i64} {
  func.func @layer_block_kernel(%arg0: i32, %arg1: memref<64x128xf32, #tpu.memory_space<vmem>>, %arg2: memref<8x4xf32, #tpu.memory_space<smem>>, %arg3: memref<8xf32, #tpu.memory_space<smem>>, %arg4: memref<8x12xf32, #tpu.memory_space<smem>>, %arg5: memref<8xf32, #tpu.memory_space<smem>>, %arg6: memref<64x128xf32, #tpu.memory_space<vmem>>) attributes {dimension_semantics = [#tpu.dimension_semantics<parallel>], iteration_bounds = array<i64: 1>, scalar_prefetch = 0 : i64, scratch_operands = 0 : i64, tpu.core_type = #tpu.core_type<tc>, window_params = [{transform_indices = @transform_0, window_bounds = array<i64: 64, 128>}, {transform_indices = @transform_1, window_bounds = array<i64: 8, 4>}, {transform_indices = @transform_2, window_bounds = array<i64: 8>}, {transform_indices = @transform_3, window_bounds = array<i64: 8, 12>}, {transform_indices = @transform_4, window_bounds = array<i64: 8>}, {transform_indices = @transform_5, window_bounds = array<i64: 64, 128>}]} {
    %cst = arith.constant 0.000000e+00 : f32
    %0 = vector.broadcast %cst : f32 to vector<2x128xf32>
    %c0 = arith.constant 0 : index
    %c0_0 = arith.constant 0 : index
    %1 = vector.load %arg1[%c0, %c0_0] : memref<64x128xf32, #tpu.memory_space<vmem>>, vector<14x128xf32>
    %c0_1 = arith.constant 0 : index
    %c0_2 = arith.constant 0 : index
    %2 = memref.load %arg4[%c0_1, %c0_2] : memref<8x12xf32, #tpu.memory_space<smem>>
    %3 = vector.broadcast %2 : f32 to vector<14x128xf32>
    %4 = arith.mulf %3, %1 : vector<14x128xf32>
    %c0_3 = arith.constant 0 : index
    %5 = memref.load %arg5[%c0_3] : memref<8xf32, #tpu.memory_space<smem>>
    %6 = vector.broadcast %5 : f32 to vector<14x128xf32>
    %7 = arith.addf %4, %6 : vector<14x128xf32>
    %c1 = arith.constant 1 : index
    %c0_4 = arith.constant 0 : index
    %8 = memref.load %arg4[%c1, %c0_4] : memref<8x12xf32, #tpu.memory_space<smem>>
    %9 = vector.broadcast %8 : f32 to vector<14x128xf32>
    %10 = arith.mulf %9, %1 : vector<14x128xf32>
    %c1_5 = arith.constant 1 : index
    %11 = memref.load %arg5[%c1_5] : memref<8xf32, #tpu.memory_space<smem>>
    %12 = vector.broadcast %11 : f32 to vector<14x128xf32>
    %13 = arith.addf %10, %12 : vector<14x128xf32>
    %c2 = arith.constant 2 : index
    %c0_6 = arith.constant 0 : index
    %14 = memref.load %arg4[%c2, %c0_6] : memref<8x12xf32, #tpu.memory_space<smem>>
    %15 = vector.broadcast %14 : f32 to vector<14x128xf32>
    %16 = arith.mulf %15, %1 : vector<14x128xf32>
    %c2_7 = arith.constant 2 : index
    %17 = memref.load %arg5[%c2_7] : memref<8xf32, #tpu.memory_space<smem>>
    %18 = vector.broadcast %17 : f32 to vector<14x128xf32>
    %19 = arith.addf %16, %18 : vector<14x128xf32>
    %c3 = arith.constant 3 : index
    %c0_8 = arith.constant 0 : index
    %20 = memref.load %arg4[%c3, %c0_8] : memref<8x12xf32, #tpu.memory_space<smem>>
    %21 = vector.broadcast %20 : f32 to vector<14x128xf32>
    %22 = arith.mulf %21, %1 : vector<14x128xf32>
    %c3_9 = arith.constant 3 : index
    %23 = memref.load %arg5[%c3_9] : memref<8xf32, #tpu.memory_space<smem>>
    %24 = vector.broadcast %23 : f32 to vector<14x128xf32>
    %25 = arith.addf %22, %24 : vector<14x128xf32>
    %c4 = arith.constant 4 : index
    %c0_10 = arith.constant 0 : index
    %26 = memref.load %arg4[%c4, %c0_10] : memref<8x12xf32, #tpu.memory_space<smem>>
    %27 = vector.broadcast %26 : f32 to vector<14x128xf32>
    %28 = arith.mulf %27, %1 : vector<14x128xf32>
    %c4_11 = arith.constant 4 : index
    %29 = memref.load %arg5[%c4_11] : memref<8xf32, #tpu.memory_space<smem>>
    %30 = vector.broadcast %29 : f32 to vector<14x128xf32>
    %31 = arith.addf %28, %30 : vector<14x128xf32>
    %c5 = arith.constant 5 : index
    %c0_12 = arith.constant 0 : index
    %32 = memref.load %arg4[%c5, %c0_12] : memref<8x12xf32, #tpu.memory_space<smem>>
    %33 = vector.broadcast %32 : f32 to vector<14x128xf32>
    %34 = arith.mulf %33, %1 : vector<14x128xf32>
    %c5_13 = arith.constant 5 : index
    %35 = memref.load %arg5[%c5_13] : memref<8xf32, #tpu.memory_space<smem>>
    %36 = vector.broadcast %35 : f32 to vector<14x128xf32>
    %37 = arith.addf %34, %36 : vector<14x128xf32>
    %c6 = arith.constant 6 : index
    %c0_14 = arith.constant 0 : index
    %38 = memref.load %arg4[%c6, %c0_14] : memref<8x12xf32, #tpu.memory_space<smem>>
    %39 = vector.broadcast %38 : f32 to vector<14x128xf32>
    %40 = arith.mulf %39, %1 : vector<14x128xf32>
    %c6_15 = arith.constant 6 : index
    %41 = memref.load %arg5[%c6_15] : memref<8xf32, #tpu.memory_space<smem>>
    %42 = vector.broadcast %41 : f32 to vector<14x128xf32>
    %43 = arith.addf %40, %42 : vector<14x128xf32>
    %c7 = arith.constant 7 : index
    %c0_16 = arith.constant 0 : index
    %44 = memref.load %arg4[%c7, %c0_16] : memref<8x12xf32, #tpu.memory_space<smem>>
    %45 = vector.broadcast %44 : f32 to vector<14x128xf32>
    %46 = arith.mulf %45, %1 : vector<14x128xf32>
    %c7_17 = arith.constant 7 : index
    %47 = memref.load %arg5[%c7_17] : memref<8xf32, #tpu.memory_space<smem>>
    %48 = vector.broadcast %47 : f32 to vector<14x128xf32>
    %49 = arith.addf %46, %48 : vector<14x128xf32>
    %c1_18 = arith.constant 1 : index
    %c0_19 = arith.constant 0 : index
    %50 = vector.load %arg1[%c1_18, %c0_19] : memref<64x128xf32, #tpu.memory_space<vmem>>, vector<14x128xf32>
    %c0_20 = arith.constant 0 : index
    %c1_21 = arith.constant 1 : index
    %51 = memref.load %arg4[%c0_20, %c1_21] : memref<8x12xf32, #tpu.memory_space<smem>>
    %52 = vector.broadcast %51 : f32 to vector<14x128xf32>
    %53 = arith.mulf %52, %50 : vector<14x128xf32>
    %54 = arith.addf %7, %53 : vector<14x128xf32>
    %c1_22 = arith.constant 1 : index
    %c1_23 = arith.constant 1 : index
    %55 = memref.load %arg4[%c1_22, %c1_23] : memref<8x12xf32, #tpu.memory_space<smem>>
    %56 = vector.broadcast %55 : f32 to vector<14x128xf32>
    %57 = arith.mulf %56, %50 : vector<14x128xf32>
    %58 = arith.addf %13, %57 : vector<14x128xf32>
    %c2_24 = arith.constant 2 : index
    %c1_25 = arith.constant 1 : index
    %59 = memref.load %arg4[%c2_24, %c1_25] : memref<8x12xf32, #tpu.memory_space<smem>>
    %60 = vector.broadcast %59 : f32 to vector<14x128xf32>
    %61 = arith.mulf %60, %50 : vector<14x128xf32>
    %62 = arith.addf %19, %61 : vector<14x128xf32>
    %c3_26 = arith.constant 3 : index
    %c1_27 = arith.constant 1 : index
    %63 = memref.load %arg4[%c3_26, %c1_27] : memref<8x12xf32, #tpu.memory_space<smem>>
    %64 = vector.broadcast %63 : f32 to vector<14x128xf32>
    %65 = arith.mulf %64, %50 : vector<14x128xf32>
    %66 = arith.addf %25, %65 : vector<14x128xf32>
    %c4_28 = arith.constant 4 : index
    %c1_29 = arith.constant 1 : index
    %67 = memref.load %arg4[%c4_28, %c1_29] : memref<8x12xf32, #tpu.memory_space<smem>>
    %68 = vector.broadcast %67 : f32 to vector<14x128xf32>
    %69 = arith.mulf %68, %50 : vector<14x128xf32>
    %70 = arith.addf %31, %69 : vector<14x128xf32>
    %c5_30 = arith.constant 5 : index
    %c1_31 = arith.constant 1 : index
    %71 = memref.load %arg4[%c5_30, %c1_31] : memref<8x12xf32, #tpu.memory_space<smem>>
    %72 = vector.broadcast %71 : f32 to vector<14x128xf32>
    %73 = arith.mulf %72, %50 : vector<14x128xf32>
    %74 = arith.addf %37, %73 : vector<14x128xf32>
    %c6_32 = arith.constant 6 : index
    %c1_33 = arith.constant 1 : index
    %75 = memref.load %arg4[%c6_32, %c1_33] : memref<8x12xf32, #tpu.memory_space<smem>>
    %76 = vector.broadcast %75 : f32 to vector<14x128xf32>
    %77 = arith.mulf %76, %50 : vector<14x128xf32>
    %78 = arith.addf %43, %77 : vector<14x128xf32>
    %c7_34 = arith.constant 7 : index
    %c1_35 = arith.constant 1 : index
    %79 = memref.load %arg4[%c7_34, %c1_35] : memref<8x12xf32, #tpu.memory_space<smem>>
    %80 = vector.broadcast %79 : f32 to vector<14x128xf32>
    %81 = arith.mulf %80, %50 : vector<14x128xf32>
    %82 = arith.addf %49, %81 : vector<14x128xf32>
    %c2_36 = arith.constant 2 : index
    %c0_37 = arith.constant 0 : index
    %83 = vector.load %arg1[%c2_36, %c0_37] : memref<64x128xf32, #tpu.memory_space<vmem>>, vector<14x128xf32>
    %c0_38 = arith.constant 0 : index
    %c2_39 = arith.constant 2 : index
    %84 = memref.load %arg4[%c0_38, %c2_39] : memref<8x12xf32, #tpu.memory_space<smem>>
    %85 = vector.broadcast %84 : f32 to vector<14x128xf32>
    %86 = arith.mulf %85, %83 : vector<14x128xf32>
    %87 = arith.addf %54, %86 : vector<14x128xf32>
    %c1_40 = arith.constant 1 : index
    %c2_41 = arith.constant 2 : index
    %88 = memref.load %arg4[%c1_40, %c2_41] : memref<8x12xf32, #tpu.memory_space<smem>>
    %89 = vector.broadcast %88 : f32 to vector<14x128xf32>
    %90 = arith.mulf %89, %83 : vector<14x128xf32>
    %91 = arith.addf %58, %90 : vector<14x128xf32>
    %c2_42 = arith.constant 2 : index
    %c2_43 = arith.constant 2 : index
    %92 = memref.load %arg4[%c2_42, %c2_43] : memref<8x12xf32, #tpu.memory_space<smem>>
    %93 = vector.broadcast %92 : f32 to vector<14x128xf32>
    %94 = arith.mulf %93, %83 : vector<14x128xf32>
    %95 = arith.addf %62, %94 : vector<14x128xf32>
    %c3_44 = arith.constant 3 : index
    %c2_45 = arith.constant 2 : index
    %96 = memref.load %arg4[%c3_44, %c2_45] : memref<8x12xf32, #tpu.memory_space<smem>>
    %97 = vector.broadcast %96 : f32 to vector<14x128xf32>
    %98 = arith.mulf %97, %83 : vector<14x128xf32>
    %99 = arith.addf %66, %98 : vector<14x128xf32>
    %c4_46 = arith.constant 4 : index
    %c2_47 = arith.constant 2 : index
    %100 = memref.load %arg4[%c4_46, %c2_47] : memref<8x12xf32, #tpu.memory_space<smem>>
    %101 = vector.broadcast %100 : f32 to vector<14x128xf32>
    %102 = arith.mulf %101, %83 : vector<14x128xf32>
    %103 = arith.addf %70, %102 : vector<14x128xf32>
    %c5_48 = arith.constant 5 : index
    %c2_49 = arith.constant 2 : index
    %104 = memref.load %arg4[%c5_48, %c2_49] : memref<8x12xf32, #tpu.memory_space<smem>>
    %105 = vector.broadcast %104 : f32 to vector<14x128xf32>
    %106 = arith.mulf %105, %83 : vector<14x128xf32>
    %107 = arith.addf %74, %106 : vector<14x128xf32>
    %c6_50 = arith.constant 6 : index
    %c2_51 = arith.constant 2 : index
    %108 = memref.load %arg4[%c6_50, %c2_51] : memref<8x12xf32, #tpu.memory_space<smem>>
    %109 = vector.broadcast %108 : f32 to vector<14x128xf32>
    %110 = arith.mulf %109, %83 : vector<14x128xf32>
    %111 = arith.addf %78, %110 : vector<14x128xf32>
    %c7_52 = arith.constant 7 : index
    %c2_53 = arith.constant 2 : index
    %112 = memref.load %arg4[%c7_52, %c2_53] : memref<8x12xf32, #tpu.memory_space<smem>>
    %113 = vector.broadcast %112 : f32 to vector<14x128xf32>
    %114 = arith.mulf %113, %83 : vector<14x128xf32>
    %115 = arith.addf %82, %114 : vector<14x128xf32>
    %c16 = arith.constant 16 : index
    %c0_54 = arith.constant 0 : index
    %116 = vector.load %arg1[%c16, %c0_54] : memref<64x128xf32, #tpu.memory_space<vmem>>, vector<14x128xf32>
    %c0_55 = arith.constant 0 : index
    %c3_56 = arith.constant 3 : index
    %117 = memref.load %arg4[%c0_55, %c3_56] : memref<8x12xf32, #tpu.memory_space<smem>>
    %118 = vector.broadcast %117 : f32 to vector<14x128xf32>
    %119 = arith.mulf %118, %116 : vector<14x128xf32>
    %120 = arith.addf %87, %119 : vector<14x128xf32>
    %c1_57 = arith.constant 1 : index
    %c3_58 = arith.constant 3 : index
    %121 = memref.load %arg4[%c1_57, %c3_58] : memref<8x12xf32, #tpu.memory_space<smem>>
    %122 = vector.broadcast %121 : f32 to vector<14x128xf32>
    %123 = arith.mulf %122, %116 : vector<14x128xf32>
    %124 = arith.addf %91, %123 : vector<14x128xf32>
    %c2_59 = arith.constant 2 : index
    %c3_60 = arith.constant 3 : index
    %125 = memref.load %arg4[%c2_59, %c3_60] : memref<8x12xf32, #tpu.memory_space<smem>>
    %126 = vector.broadcast %125 : f32 to vector<14x128xf32>
    %127 = arith.mulf %126, %116 : vector<14x128xf32>
    %128 = arith.addf %95, %127 : vector<14x128xf32>
    %c3_61 = arith.constant 3 : index
    %c3_62 = arith.constant 3 : index
    %129 = memref.load %arg4[%c3_61, %c3_62] : memref<8x12xf32, #tpu.memory_space<smem>>
    %130 = vector.broadcast %129 : f32 to vector<14x128xf32>
    %131 = arith.mulf %130, %116 : vector<14x128xf32>
    %132 = arith.addf %99, %131 : vector<14x128xf32>
    %c4_63 = arith.constant 4 : index
    %c3_64 = arith.constant 3 : index
    %133 = memref.load %arg4[%c4_63, %c3_64] : memref<8x12xf32, #tpu.memory_space<smem>>
    %134 = vector.broadcast %133 : f32 to vector<14x128xf32>
    %135 = arith.mulf %134, %116 : vector<14x128xf32>
    %136 = arith.addf %103, %135 : vector<14x128xf32>
    %c5_65 = arith.constant 5 : index
    %c3_66 = arith.constant 3 : index
    %137 = memref.load %arg4[%c5_65, %c3_66] : memref<8x12xf32, #tpu.memory_space<smem>>
    %138 = vector.broadcast %137 : f32 to vector<14x128xf32>
    %139 = arith.mulf %138, %116 : vector<14x128xf32>
    %140 = arith.addf %107, %139 : vector<14x128xf32>
    %c6_67 = arith.constant 6 : index
    %c3_68 = arith.constant 3 : index
    %141 = memref.load %arg4[%c6_67, %c3_68] : memref<8x12xf32, #tpu.memory_space<smem>>
    %142 = vector.broadcast %141 : f32 to vector<14x128xf32>
    %143 = arith.mulf %142, %116 : vector<14x128xf32>
    %144 = arith.addf %111, %143 : vector<14x128xf32>
    %c7_69 = arith.constant 7 : index
    %c3_70 = arith.constant 3 : index
    %145 = memref.load %arg4[%c7_69, %c3_70] : memref<8x12xf32, #tpu.memory_space<smem>>
    %146 = vector.broadcast %145 : f32 to vector<14x128xf32>
    %147 = arith.mulf %146, %116 : vector<14x128xf32>
    %148 = arith.addf %115, %147 : vector<14x128xf32>
    %c17 = arith.constant 17 : index
    %c0_71 = arith.constant 0 : index
    %149 = vector.load %arg1[%c17, %c0_71] : memref<64x128xf32, #tpu.memory_space<vmem>>, vector<14x128xf32>
    %c0_72 = arith.constant 0 : index
    %c4_73 = arith.constant 4 : index
    %150 = memref.load %arg4[%c0_72, %c4_73] : memref<8x12xf32, #tpu.memory_space<smem>>
    %151 = vector.broadcast %150 : f32 to vector<14x128xf32>
    %152 = arith.mulf %151, %149 : vector<14x128xf32>
    %153 = arith.addf %120, %152 : vector<14x128xf32>
    %c1_74 = arith.constant 1 : index
    %c4_75 = arith.constant 4 : index
    %154 = memref.load %arg4[%c1_74, %c4_75] : memref<8x12xf32, #tpu.memory_space<smem>>
    %155 = vector.broadcast %154 : f32 to vector<14x128xf32>
    %156 = arith.mulf %155, %149 : vector<14x128xf32>
    %157 = arith.addf %124, %156 : vector<14x128xf32>
    %c2_76 = arith.constant 2 : index
    %c4_77 = arith.constant 4 : index
    %158 = memref.load %arg4[%c2_76, %c4_77] : memref<8x12xf32, #tpu.memory_space<smem>>
    %159 = vector.broadcast %158 : f32 to vector<14x128xf32>
    %160 = arith.mulf %159, %149 : vector<14x128xf32>
    %161 = arith.addf %128, %160 : vector<14x128xf32>
    %c3_78 = arith.constant 3 : index
    %c4_79 = arith.constant 4 : index
    %162 = memref.load %arg4[%c3_78, %c4_79] : memref<8x12xf32, #tpu.memory_space<smem>>
    %163 = vector.broadcast %162 : f32 to vector<14x128xf32>
    %164 = arith.mulf %163, %149 : vector<14x128xf32>
    %165 = arith.addf %132, %164 : vector<14x128xf32>
    %c4_80 = arith.constant 4 : index
    %c4_81 = arith.constant 4 : index
    %166 = memref.load %arg4[%c4_80, %c4_81] : memref<8x12xf32, #tpu.memory_space<smem>>
    %167 = vector.broadcast %166 : f32 to vector<14x128xf32>
    %168 = arith.mulf %167, %149 : vector<14x128xf32>
    %169 = arith.addf %136, %168 : vector<14x128xf32>
    %c5_82 = arith.constant 5 : index
    %c4_83 = arith.constant 4 : index
    %170 = memref.load %arg4[%c5_82, %c4_83] : memref<8x12xf32, #tpu.memory_space<smem>>
    %171 = vector.broadcast %170 : f32 to vector<14x128xf32>
    %172 = arith.mulf %171, %149 : vector<14x128xf32>
    %173 = arith.addf %140, %172 : vector<14x128xf32>
    %c6_84 = arith.constant 6 : index
    %c4_85 = arith.constant 4 : index
    %174 = memref.load %arg4[%c6_84, %c4_85] : memref<8x12xf32, #tpu.memory_space<smem>>
    %175 = vector.broadcast %174 : f32 to vector<14x128xf32>
    %176 = arith.mulf %175, %149 : vector<14x128xf32>
    %177 = arith.addf %144, %176 : vector<14x128xf32>
    %c7_86 = arith.constant 7 : index
    %c4_87 = arith.constant 4 : index
    %178 = memref.load %arg4[%c7_86, %c4_87] : memref<8x12xf32, #tpu.memory_space<smem>>
    %179 = vector.broadcast %178 : f32 to vector<14x128xf32>
    %180 = arith.mulf %179, %149 : vector<14x128xf32>
    %181 = arith.addf %148, %180 : vector<14x128xf32>
    %c18 = arith.constant 18 : index
    %c0_88 = arith.constant 0 : index
    %182 = vector.load %arg1[%c18, %c0_88] : memref<64x128xf32, #tpu.memory_space<vmem>>, vector<14x128xf32>
    %c0_89 = arith.constant 0 : index
    %c5_90 = arith.constant 5 : index
    %183 = memref.load %arg4[%c0_89, %c5_90] : memref<8x12xf32, #tpu.memory_space<smem>>
    %184 = vector.broadcast %183 : f32 to vector<14x128xf32>
    %185 = arith.mulf %184, %182 : vector<14x128xf32>
    %186 = arith.addf %153, %185 : vector<14x128xf32>
    %c1_91 = arith.constant 1 : index
    %c5_92 = arith.constant 5 : index
    %187 = memref.load %arg4[%c1_91, %c5_92] : memref<8x12xf32, #tpu.memory_space<smem>>
    %188 = vector.broadcast %187 : f32 to vector<14x128xf32>
    %189 = arith.mulf %188, %182 : vector<14x128xf32>
    %190 = arith.addf %157, %189 : vector<14x128xf32>
    %c2_93 = arith.constant 2 : index
    %c5_94 = arith.constant 5 : index
    %191 = memref.load %arg4[%c2_93, %c5_94] : memref<8x12xf32, #tpu.memory_space<smem>>
    %192 = vector.broadcast %191 : f32 to vector<14x128xf32>
    %193 = arith.mulf %192, %182 : vector<14x128xf32>
    %194 = arith.addf %161, %193 : vector<14x128xf32>
    %c3_95 = arith.constant 3 : index
    %c5_96 = arith.constant 5 : index
    %195 = memref.load %arg4[%c3_95, %c5_96] : memref<8x12xf32, #tpu.memory_space<smem>>
    %196 = vector.broadcast %195 : f32 to vector<14x128xf32>
    %197 = arith.mulf %196, %182 : vector<14x128xf32>
    %198 = arith.addf %165, %197 : vector<14x128xf32>
    %c4_97 = arith.constant 4 : index
    %c5_98 = arith.constant 5 : index
    %199 = memref.load %arg4[%c4_97, %c5_98] : memref<8x12xf32, #tpu.memory_space<smem>>
    %200 = vector.broadcast %199 : f32 to vector<14x128xf32>
    %201 = arith.mulf %200, %182 : vector<14x128xf32>
    %202 = arith.addf %169, %201 : vector<14x128xf32>
    %c5_99 = arith.constant 5 : index
    %c5_100 = arith.constant 5 : index
    %203 = memref.load %arg4[%c5_99, %c5_100] : memref<8x12xf32, #tpu.memory_space<smem>>
    %204 = vector.broadcast %203 : f32 to vector<14x128xf32>
    %205 = arith.mulf %204, %182 : vector<14x128xf32>
    %206 = arith.addf %173, %205 : vector<14x128xf32>
    %c6_101 = arith.constant 6 : index
    %c5_102 = arith.constant 5 : index
    %207 = memref.load %arg4[%c6_101, %c5_102] : memref<8x12xf32, #tpu.memory_space<smem>>
    %208 = vector.broadcast %207 : f32 to vector<14x128xf32>
    %209 = arith.mulf %208, %182 : vector<14x128xf32>
    %210 = arith.addf %177, %209 : vector<14x128xf32>
    %c7_103 = arith.constant 7 : index
    %c5_104 = arith.constant 5 : index
    %211 = memref.load %arg4[%c7_103, %c5_104] : memref<8x12xf32, #tpu.memory_space<smem>>
    %212 = vector.broadcast %211 : f32 to vector<14x128xf32>
    %213 = arith.mulf %212, %182 : vector<14x128xf32>
    %214 = arith.addf %181, %213 : vector<14x128xf32>
    %c32 = arith.constant 32 : index
    %c0_105 = arith.constant 0 : index
    %215 = vector.load %arg1[%c32, %c0_105] : memref<64x128xf32, #tpu.memory_space<vmem>>, vector<14x128xf32>
    %c0_106 = arith.constant 0 : index
    %c6_107 = arith.constant 6 : index
    %216 = memref.load %arg4[%c0_106, %c6_107] : memref<8x12xf32, #tpu.memory_space<smem>>
    %217 = vector.broadcast %216 : f32 to vector<14x128xf32>
    %218 = arith.mulf %217, %215 : vector<14x128xf32>
    %219 = arith.addf %186, %218 : vector<14x128xf32>
    %c1_108 = arith.constant 1 : index
    %c6_109 = arith.constant 6 : index
    %220 = memref.load %arg4[%c1_108, %c6_109] : memref<8x12xf32, #tpu.memory_space<smem>>
    %221 = vector.broadcast %220 : f32 to vector<14x128xf32>
    %222 = arith.mulf %221, %215 : vector<14x128xf32>
    %223 = arith.addf %190, %222 : vector<14x128xf32>
    %c2_110 = arith.constant 2 : index
    %c6_111 = arith.constant 6 : index
    %224 = memref.load %arg4[%c2_110, %c6_111] : memref<8x12xf32, #tpu.memory_space<smem>>
    %225 = vector.broadcast %224 : f32 to vector<14x128xf32>
    %226 = arith.mulf %225, %215 : vector<14x128xf32>
    %227 = arith.addf %194, %226 : vector<14x128xf32>
    %c3_112 = arith.constant 3 : index
    %c6_113 = arith.constant 6 : index
    %228 = memref.load %arg4[%c3_112, %c6_113] : memref<8x12xf32, #tpu.memory_space<smem>>
    %229 = vector.broadcast %228 : f32 to vector<14x128xf32>
    %230 = arith.mulf %229, %215 : vector<14x128xf32>
    %231 = arith.addf %198, %230 : vector<14x128xf32>
    %c4_114 = arith.constant 4 : index
    %c6_115 = arith.constant 6 : index
    %232 = memref.load %arg4[%c4_114, %c6_115] : memref<8x12xf32, #tpu.memory_space<smem>>
    %233 = vector.broadcast %232 : f32 to vector<14x128xf32>
    %234 = arith.mulf %233, %215 : vector<14x128xf32>
    %235 = arith.addf %202, %234 : vector<14x128xf32>
    %c5_116 = arith.constant 5 : index
    %c6_117 = arith.constant 6 : index
    %236 = memref.load %arg4[%c5_116, %c6_117] : memref<8x12xf32, #tpu.memory_space<smem>>
    %237 = vector.broadcast %236 : f32 to vector<14x128xf32>
    %238 = arith.mulf %237, %215 : vector<14x128xf32>
    %239 = arith.addf %206, %238 : vector<14x128xf32>
    %c6_118 = arith.constant 6 : index
    %c6_119 = arith.constant 6 : index
    %240 = memref.load %arg4[%c6_118, %c6_119] : memref<8x12xf32, #tpu.memory_space<smem>>
    %241 = vector.broadcast %240 : f32 to vector<14x128xf32>
    %242 = arith.mulf %241, %215 : vector<14x128xf32>
    %243 = arith.addf %210, %242 : vector<14x128xf32>
    %c7_120 = arith.constant 7 : index
    %c6_121 = arith.constant 6 : index
    %244 = memref.load %arg4[%c7_120, %c6_121] : memref<8x12xf32, #tpu.memory_space<smem>>
    %245 = vector.broadcast %244 : f32 to vector<14x128xf32>
    %246 = arith.mulf %245, %215 : vector<14x128xf32>
    %247 = arith.addf %214, %246 : vector<14x128xf32>
    %c33 = arith.constant 33 : index
    %c0_122 = arith.constant 0 : index
    %248 = vector.load %arg1[%c33, %c0_122] : memref<64x128xf32, #tpu.memory_space<vmem>>, vector<14x128xf32>
    %c0_123 = arith.constant 0 : index
    %c7_124 = arith.constant 7 : index
    %249 = memref.load %arg4[%c0_123, %c7_124] : memref<8x12xf32, #tpu.memory_space<smem>>
    %250 = vector.broadcast %249 : f32 to vector<14x128xf32>
    %251 = arith.mulf %250, %248 : vector<14x128xf32>
    %252 = arith.addf %219, %251 : vector<14x128xf32>
    %c1_125 = arith.constant 1 : index
    %c7_126 = arith.constant 7 : index
    %253 = memref.load %arg4[%c1_125, %c7_126] : memref<8x12xf32, #tpu.memory_space<smem>>
    %254 = vector.broadcast %253 : f32 to vector<14x128xf32>
    %255 = arith.mulf %254, %248 : vector<14x128xf32>
    %256 = arith.addf %223, %255 : vector<14x128xf32>
    %c2_127 = arith.constant 2 : index
    %c7_128 = arith.constant 7 : index
    %257 = memref.load %arg4[%c2_127, %c7_128] : memref<8x12xf32, #tpu.memory_space<smem>>
    %258 = vector.broadcast %257 : f32 to vector<14x128xf32>
    %259 = arith.mulf %258, %248 : vector<14x128xf32>
    %260 = arith.addf %227, %259 : vector<14x128xf32>
    %c3_129 = arith.constant 3 : index
    %c7_130 = arith.constant 7 : index
    %261 = memref.load %arg4[%c3_129, %c7_130] : memref<8x12xf32, #tpu.memory_space<smem>>
    %262 = vector.broadcast %261 : f32 to vector<14x128xf32>
    %263 = arith.mulf %262, %248 : vector<14x128xf32>
    %264 = arith.addf %231, %263 : vector<14x128xf32>
    %c4_131 = arith.constant 4 : index
    %c7_132 = arith.constant 7 : index
    %265 = memref.load %arg4[%c4_131, %c7_132] : memref<8x12xf32, #tpu.memory_space<smem>>
    %266 = vector.broadcast %265 : f32 to vector<14x128xf32>
    %267 = arith.mulf %266, %248 : vector<14x128xf32>
    %268 = arith.addf %235, %267 : vector<14x128xf32>
    %c5_133 = arith.constant 5 : index
    %c7_134 = arith.constant 7 : index
    %269 = memref.load %arg4[%c5_133, %c7_134] : memref<8x12xf32, #tpu.memory_space<smem>>
    %270 = vector.broadcast %269 : f32 to vector<14x128xf32>
    %271 = arith.mulf %270, %248 : vector<14x128xf32>
    %272 = arith.addf %239, %271 : vector<14x128xf32>
    %c6_135 = arith.constant 6 : index
    %c7_136 = arith.constant 7 : index
    %273 = memref.load %arg4[%c6_135, %c7_136] : memref<8x12xf32, #tpu.memory_space<smem>>
    %274 = vector.broadcast %273 : f32 to vector<14x128xf32>
    %275 = arith.mulf %274, %248 : vector<14x128xf32>
    %276 = arith.addf %243, %275 : vector<14x128xf32>
    %c7_137 = arith.constant 7 : index
    %c7_138 = arith.constant 7 : index
    %277 = memref.load %arg4[%c7_137, %c7_138] : memref<8x12xf32, #tpu.memory_space<smem>>
    %278 = vector.broadcast %277 : f32 to vector<14x128xf32>
    %279 = arith.mulf %278, %248 : vector<14x128xf32>
    %280 = arith.addf %247, %279 : vector<14x128xf32>
    %c34 = arith.constant 34 : index
    %c0_139 = arith.constant 0 : index
    %281 = vector.load %arg1[%c34, %c0_139] : memref<64x128xf32, #tpu.memory_space<vmem>>, vector<14x128xf32>
    %c0_140 = arith.constant 0 : index
    %c8 = arith.constant 8 : index
    %282 = memref.load %arg4[%c0_140, %c8] : memref<8x12xf32, #tpu.memory_space<smem>>
    %283 = vector.broadcast %282 : f32 to vector<14x128xf32>
    %284 = arith.mulf %283, %281 : vector<14x128xf32>
    %285 = arith.addf %252, %284 : vector<14x128xf32>
    %c1_141 = arith.constant 1 : index
    %c8_142 = arith.constant 8 : index
    %286 = memref.load %arg4[%c1_141, %c8_142] : memref<8x12xf32, #tpu.memory_space<smem>>
    %287 = vector.broadcast %286 : f32 to vector<14x128xf32>
    %288 = arith.mulf %287, %281 : vector<14x128xf32>
    %289 = arith.addf %256, %288 : vector<14x128xf32>
    %c2_143 = arith.constant 2 : index
    %c8_144 = arith.constant 8 : index
    %290 = memref.load %arg4[%c2_143, %c8_144] : memref<8x12xf32, #tpu.memory_space<smem>>
    %291 = vector.broadcast %290 : f32 to vector<14x128xf32>
    %292 = arith.mulf %291, %281 : vector<14x128xf32>
    %293 = arith.addf %260, %292 : vector<14x128xf32>
    %c3_145 = arith.constant 3 : index
    %c8_146 = arith.constant 8 : index
    %294 = memref.load %arg4[%c3_145, %c8_146] : memref<8x12xf32, #tpu.memory_space<smem>>
    %295 = vector.broadcast %294 : f32 to vector<14x128xf32>
    %296 = arith.mulf %295, %281 : vector<14x128xf32>
    %297 = arith.addf %264, %296 : vector<14x128xf32>
    %c4_147 = arith.constant 4 : index
    %c8_148 = arith.constant 8 : index
    %298 = memref.load %arg4[%c4_147, %c8_148] : memref<8x12xf32, #tpu.memory_space<smem>>
    %299 = vector.broadcast %298 : f32 to vector<14x128xf32>
    %300 = arith.mulf %299, %281 : vector<14x128xf32>
    %301 = arith.addf %268, %300 : vector<14x128xf32>
    %c5_149 = arith.constant 5 : index
    %c8_150 = arith.constant 8 : index
    %302 = memref.load %arg4[%c5_149, %c8_150] : memref<8x12xf32, #tpu.memory_space<smem>>
    %303 = vector.broadcast %302 : f32 to vector<14x128xf32>
    %304 = arith.mulf %303, %281 : vector<14x128xf32>
    %305 = arith.addf %272, %304 : vector<14x128xf32>
    %c6_151 = arith.constant 6 : index
    %c8_152 = arith.constant 8 : index
    %306 = memref.load %arg4[%c6_151, %c8_152] : memref<8x12xf32, #tpu.memory_space<smem>>
    %307 = vector.broadcast %306 : f32 to vector<14x128xf32>
    %308 = arith.mulf %307, %281 : vector<14x128xf32>
    %309 = arith.addf %276, %308 : vector<14x128xf32>
    %c7_153 = arith.constant 7 : index
    %c8_154 = arith.constant 8 : index
    %310 = memref.load %arg4[%c7_153, %c8_154] : memref<8x12xf32, #tpu.memory_space<smem>>
    %311 = vector.broadcast %310 : f32 to vector<14x128xf32>
    %312 = arith.mulf %311, %281 : vector<14x128xf32>
    %313 = arith.addf %280, %312 : vector<14x128xf32>
    %c48 = arith.constant 48 : index
    %c0_155 = arith.constant 0 : index
    %314 = vector.load %arg1[%c48, %c0_155] : memref<64x128xf32, #tpu.memory_space<vmem>>, vector<14x128xf32>
    %c0_156 = arith.constant 0 : index
    %c9 = arith.constant 9 : index
    %315 = memref.load %arg4[%c0_156, %c9] : memref<8x12xf32, #tpu.memory_space<smem>>
    %316 = vector.broadcast %315 : f32 to vector<14x128xf32>
    %317 = arith.mulf %316, %314 : vector<14x128xf32>
    %318 = arith.addf %285, %317 : vector<14x128xf32>
    %c1_157 = arith.constant 1 : index
    %c9_158 = arith.constant 9 : index
    %319 = memref.load %arg4[%c1_157, %c9_158] : memref<8x12xf32, #tpu.memory_space<smem>>
    %320 = vector.broadcast %319 : f32 to vector<14x128xf32>
    %321 = arith.mulf %320, %314 : vector<14x128xf32>
    %322 = arith.addf %289, %321 : vector<14x128xf32>
    %c2_159 = arith.constant 2 : index
    %c9_160 = arith.constant 9 : index
    %323 = memref.load %arg4[%c2_159, %c9_160] : memref<8x12xf32, #tpu.memory_space<smem>>
    %324 = vector.broadcast %323 : f32 to vector<14x128xf32>
    %325 = arith.mulf %324, %314 : vector<14x128xf32>
    %326 = arith.addf %293, %325 : vector<14x128xf32>
    %c3_161 = arith.constant 3 : index
    %c9_162 = arith.constant 9 : index
    %327 = memref.load %arg4[%c3_161, %c9_162] : memref<8x12xf32, #tpu.memory_space<smem>>
    %328 = vector.broadcast %327 : f32 to vector<14x128xf32>
    %329 = arith.mulf %328, %314 : vector<14x128xf32>
    %330 = arith.addf %297, %329 : vector<14x128xf32>
    %c4_163 = arith.constant 4 : index
    %c9_164 = arith.constant 9 : index
    %331 = memref.load %arg4[%c4_163, %c9_164] : memref<8x12xf32, #tpu.memory_space<smem>>
    %332 = vector.broadcast %331 : f32 to vector<14x128xf32>
    %333 = arith.mulf %332, %314 : vector<14x128xf32>
    %334 = arith.addf %301, %333 : vector<14x128xf32>
    %c5_165 = arith.constant 5 : index
    %c9_166 = arith.constant 9 : index
    %335 = memref.load %arg4[%c5_165, %c9_166] : memref<8x12xf32, #tpu.memory_space<smem>>
    %336 = vector.broadcast %335 : f32 to vector<14x128xf32>
    %337 = arith.mulf %336, %314 : vector<14x128xf32>
    %338 = arith.addf %305, %337 : vector<14x128xf32>
    %c6_167 = arith.constant 6 : index
    %c9_168 = arith.constant 9 : index
    %339 = memref.load %arg4[%c6_167, %c9_168] : memref<8x12xf32, #tpu.memory_space<smem>>
    %340 = vector.broadcast %339 : f32 to vector<14x128xf32>
    %341 = arith.mulf %340, %314 : vector<14x128xf32>
    %342 = arith.addf %309, %341 : vector<14x128xf32>
    %c7_169 = arith.constant 7 : index
    %c9_170 = arith.constant 9 : index
    %343 = memref.load %arg4[%c7_169, %c9_170] : memref<8x12xf32, #tpu.memory_space<smem>>
    %344 = vector.broadcast %343 : f32 to vector<14x128xf32>
    %345 = arith.mulf %344, %314 : vector<14x128xf32>
    %346 = arith.addf %313, %345 : vector<14x128xf32>
    %c49 = arith.constant 49 : index
    %c0_171 = arith.constant 0 : index
    %347 = vector.load %arg1[%c49, %c0_171] : memref<64x128xf32, #tpu.memory_space<vmem>>, vector<14x128xf32>
    %c0_172 = arith.constant 0 : index
    %c10 = arith.constant 10 : index
    %348 = memref.load %arg4[%c0_172, %c10] : memref<8x12xf32, #tpu.memory_space<smem>>
    %349 = vector.broadcast %348 : f32 to vector<14x128xf32>
    %350 = arith.mulf %349, %347 : vector<14x128xf32>
    %351 = arith.addf %318, %350 : vector<14x128xf32>
    %c1_173 = arith.constant 1 : index
    %c10_174 = arith.constant 10 : index
    %352 = memref.load %arg4[%c1_173, %c10_174] : memref<8x12xf32, #tpu.memory_space<smem>>
    %353 = vector.broadcast %352 : f32 to vector<14x128xf32>
    %354 = arith.mulf %353, %347 : vector<14x128xf32>
    %355 = arith.addf %322, %354 : vector<14x128xf32>
    %c2_175 = arith.constant 2 : index
    %c10_176 = arith.constant 10 : index
    %356 = memref.load %arg4[%c2_175, %c10_176] : memref<8x12xf32, #tpu.memory_space<smem>>
    %357 = vector.broadcast %356 : f32 to vector<14x128xf32>
    %358 = arith.mulf %357, %347 : vector<14x128xf32>
    %359 = arith.addf %326, %358 : vector<14x128xf32>
    %c3_177 = arith.constant 3 : index
    %c10_178 = arith.constant 10 : index
    %360 = memref.load %arg4[%c3_177, %c10_178] : memref<8x12xf32, #tpu.memory_space<smem>>
    %361 = vector.broadcast %360 : f32 to vector<14x128xf32>
    %362 = arith.mulf %361, %347 : vector<14x128xf32>
    %363 = arith.addf %330, %362 : vector<14x128xf32>
    %c4_179 = arith.constant 4 : index
    %c10_180 = arith.constant 10 : index
    %364 = memref.load %arg4[%c4_179, %c10_180] : memref<8x12xf32, #tpu.memory_space<smem>>
    %365 = vector.broadcast %364 : f32 to vector<14x128xf32>
    %366 = arith.mulf %365, %347 : vector<14x128xf32>
    %367 = arith.addf %334, %366 : vector<14x128xf32>
    %c5_181 = arith.constant 5 : index
    %c10_182 = arith.constant 10 : index
    %368 = memref.load %arg4[%c5_181, %c10_182] : memref<8x12xf32, #tpu.memory_space<smem>>
    %369 = vector.broadcast %368 : f32 to vector<14x128xf32>
    %370 = arith.mulf %369, %347 : vector<14x128xf32>
    %371 = arith.addf %338, %370 : vector<14x128xf32>
    %c6_183 = arith.constant 6 : index
    %c10_184 = arith.constant 10 : index
    %372 = memref.load %arg4[%c6_183, %c10_184] : memref<8x12xf32, #tpu.memory_space<smem>>
    %373 = vector.broadcast %372 : f32 to vector<14x128xf32>
    %374 = arith.mulf %373, %347 : vector<14x128xf32>
    %375 = arith.addf %342, %374 : vector<14x128xf32>
    %c7_185 = arith.constant 7 : index
    %c10_186 = arith.constant 10 : index
    %376 = memref.load %arg4[%c7_185, %c10_186] : memref<8x12xf32, #tpu.memory_space<smem>>
    %377 = vector.broadcast %376 : f32 to vector<14x128xf32>
    %378 = arith.mulf %377, %347 : vector<14x128xf32>
    %379 = arith.addf %346, %378 : vector<14x128xf32>
    %c50 = arith.constant 50 : index
    %c0_187 = arith.constant 0 : index
    %380 = vector.load %arg1[%c50, %c0_187] : memref<64x128xf32, #tpu.memory_space<vmem>>, vector<14x128xf32>
    %c0_188 = arith.constant 0 : index
    %c11 = arith.constant 11 : index
    %381 = memref.load %arg4[%c0_188, %c11] : memref<8x12xf32, #tpu.memory_space<smem>>
    %382 = vector.broadcast %381 : f32 to vector<14x128xf32>
    %383 = arith.mulf %382, %380 : vector<14x128xf32>
    %384 = arith.addf %351, %383 : vector<14x128xf32>
    %c1_189 = arith.constant 1 : index
    %c11_190 = arith.constant 11 : index
    %385 = memref.load %arg4[%c1_189, %c11_190] : memref<8x12xf32, #tpu.memory_space<smem>>
    %386 = vector.broadcast %385 : f32 to vector<14x128xf32>
    %387 = arith.mulf %386, %380 : vector<14x128xf32>
    %388 = arith.addf %355, %387 : vector<14x128xf32>
    %c2_191 = arith.constant 2 : index
    %c11_192 = arith.constant 11 : index
    %389 = memref.load %arg4[%c2_191, %c11_192] : memref<8x12xf32, #tpu.memory_space<smem>>
    %390 = vector.broadcast %389 : f32 to vector<14x128xf32>
    %391 = arith.mulf %390, %380 : vector<14x128xf32>
    %392 = arith.addf %359, %391 : vector<14x128xf32>
    %c3_193 = arith.constant 3 : index
    %c11_194 = arith.constant 11 : index
    %393 = memref.load %arg4[%c3_193, %c11_194] : memref<8x12xf32, #tpu.memory_space<smem>>
    %394 = vector.broadcast %393 : f32 to vector<14x128xf32>
    %395 = arith.mulf %394, %380 : vector<14x128xf32>
    %396 = arith.addf %363, %395 : vector<14x128xf32>
    %c4_195 = arith.constant 4 : index
    %c11_196 = arith.constant 11 : index
    %397 = memref.load %arg4[%c4_195, %c11_196] : memref<8x12xf32, #tpu.memory_space<smem>>
    %398 = vector.broadcast %397 : f32 to vector<14x128xf32>
    %399 = arith.mulf %398, %380 : vector<14x128xf32>
    %400 = arith.addf %367, %399 : vector<14x128xf32>
    %c5_197 = arith.constant 5 : index
    %c11_198 = arith.constant 11 : index
    %401 = memref.load %arg4[%c5_197, %c11_198] : memref<8x12xf32, #tpu.memory_space<smem>>
    %402 = vector.broadcast %401 : f32 to vector<14x128xf32>
    %403 = arith.mulf %402, %380 : vector<14x128xf32>
    %404 = arith.addf %371, %403 : vector<14x128xf32>
    %c6_199 = arith.constant 6 : index
    %c11_200 = arith.constant 11 : index
    %405 = memref.load %arg4[%c6_199, %c11_200] : memref<8x12xf32, #tpu.memory_space<smem>>
    %406 = vector.broadcast %405 : f32 to vector<14x128xf32>
    %407 = arith.mulf %406, %380 : vector<14x128xf32>
    %408 = arith.addf %375, %407 : vector<14x128xf32>
    %c7_201 = arith.constant 7 : index
    %c11_202 = arith.constant 11 : index
    %409 = memref.load %arg4[%c7_201, %c11_202] : memref<8x12xf32, #tpu.memory_space<smem>>
    %410 = vector.broadcast %409 : f32 to vector<14x128xf32>
    %411 = arith.mulf %410, %380 : vector<14x128xf32>
    %412 = arith.addf %379, %411 : vector<14x128xf32>
    %c4_203 = arith.constant 4 : index
    %c0_204 = arith.constant 0 : index
    %413 = vector.load %arg1[%c4_203, %c0_204] : memref<64x128xf32, #tpu.memory_space<vmem>>, vector<11x128xf32>
    %414 = vector.extract_strided_slice %413 {offsets = [0, 0], sizes = [1, 128], strides = [1, 1]} : vector<11x128xf32> to vector<1x128xf32>
    %415 = vector.extract_strided_slice %413 {offsets = [2, 0], sizes = [1, 128], strides = [1, 1]} : vector<11x128xf32> to vector<1x128xf32>
    %416 = vector.extract_strided_slice %413 {offsets = [4, 0], sizes = [1, 128], strides = [1, 1]} : vector<11x128xf32> to vector<1x128xf32>
    %417 = vector.extract_strided_slice %413 {offsets = [6, 0], sizes = [1, 128], strides = [1, 1]} : vector<11x128xf32> to vector<1x128xf32>
    %418 = vector.extract_strided_slice %413 {offsets = [8, 0], sizes = [1, 128], strides = [1, 1]} : vector<11x128xf32> to vector<1x128xf32>
    %419 = vector.extract_strided_slice %413 {offsets = [10, 0], sizes = [1, 128], strides = [1, 1]} : vector<11x128xf32> to vector<1x128xf32>
    %420 = tpu.concatenate %414, %415, %416, %417, %418, %419 in 0 : vector<1x128xf32>, vector<1x128xf32>, vector<1x128xf32>, vector<1x128xf32>, vector<1x128xf32>, vector<1x128xf32> -> vector<6x128xf32>
    %c0_205 = arith.constant 0 : index
    %c0_206 = arith.constant 0 : index
    %421 = memref.load %arg2[%c0_205, %c0_206] : memref<8x4xf32, #tpu.memory_space<smem>>
    %422 = vector.broadcast %421 : f32 to vector<6x128xf32>
    %423 = arith.mulf %422, %420 : vector<6x128xf32>
    %c0_207 = arith.constant 0 : index
    %424 = memref.load %arg3[%c0_207] : memref<8xf32, #tpu.memory_space<smem>>
    %425 = vector.broadcast %424 : f32 to vector<6x128xf32>
    %426 = arith.addf %423, %425 : vector<6x128xf32>
    %c1_208 = arith.constant 1 : index
    %c0_209 = arith.constant 0 : index
    %427 = memref.load %arg2[%c1_208, %c0_209] : memref<8x4xf32, #tpu.memory_space<smem>>
    %428 = vector.broadcast %427 : f32 to vector<6x128xf32>
    %429 = arith.mulf %428, %420 : vector<6x128xf32>
    %c1_210 = arith.constant 1 : index
    %430 = memref.load %arg3[%c1_210] : memref<8xf32, #tpu.memory_space<smem>>
    %431 = vector.broadcast %430 : f32 to vector<6x128xf32>
    %432 = arith.addf %429, %431 : vector<6x128xf32>
    %c2_211 = arith.constant 2 : index
    %c0_212 = arith.constant 0 : index
    %433 = memref.load %arg2[%c2_211, %c0_212] : memref<8x4xf32, #tpu.memory_space<smem>>
    %434 = vector.broadcast %433 : f32 to vector<6x128xf32>
    %435 = arith.mulf %434, %420 : vector<6x128xf32>
    %c2_213 = arith.constant 2 : index
    %436 = memref.load %arg3[%c2_213] : memref<8xf32, #tpu.memory_space<smem>>
    %437 = vector.broadcast %436 : f32 to vector<6x128xf32>
    %438 = arith.addf %435, %437 : vector<6x128xf32>
    %c3_214 = arith.constant 3 : index
    %c0_215 = arith.constant 0 : index
    %439 = memref.load %arg2[%c3_214, %c0_215] : memref<8x4xf32, #tpu.memory_space<smem>>
    %440 = vector.broadcast %439 : f32 to vector<6x128xf32>
    %441 = arith.mulf %440, %420 : vector<6x128xf32>
    %c3_216 = arith.constant 3 : index
    %442 = memref.load %arg3[%c3_216] : memref<8xf32, #tpu.memory_space<smem>>
    %443 = vector.broadcast %442 : f32 to vector<6x128xf32>
    %444 = arith.addf %441, %443 : vector<6x128xf32>
    %c4_217 = arith.constant 4 : index
    %c0_218 = arith.constant 0 : index
    %445 = memref.load %arg2[%c4_217, %c0_218] : memref<8x4xf32, #tpu.memory_space<smem>>
    %446 = vector.broadcast %445 : f32 to vector<6x128xf32>
    %447 = arith.mulf %446, %420 : vector<6x128xf32>
    %c4_219 = arith.constant 4 : index
    %448 = memref.load %arg3[%c4_219] : memref<8xf32, #tpu.memory_space<smem>>
    %449 = vector.broadcast %448 : f32 to vector<6x128xf32>
    %450 = arith.addf %447, %449 : vector<6x128xf32>
    %c5_220 = arith.constant 5 : index
    %c0_221 = arith.constant 0 : index
    %451 = memref.load %arg2[%c5_220, %c0_221] : memref<8x4xf32, #tpu.memory_space<smem>>
    %452 = vector.broadcast %451 : f32 to vector<6x128xf32>
    %453 = arith.mulf %452, %420 : vector<6x128xf32>
    %c5_222 = arith.constant 5 : index
    %454 = memref.load %arg3[%c5_222] : memref<8xf32, #tpu.memory_space<smem>>
    %455 = vector.broadcast %454 : f32 to vector<6x128xf32>
    %456 = arith.addf %453, %455 : vector<6x128xf32>
    %c6_223 = arith.constant 6 : index
    %c0_224 = arith.constant 0 : index
    %457 = memref.load %arg2[%c6_223, %c0_224] : memref<8x4xf32, #tpu.memory_space<smem>>
    %458 = vector.broadcast %457 : f32 to vector<6x128xf32>
    %459 = arith.mulf %458, %420 : vector<6x128xf32>
    %c6_225 = arith.constant 6 : index
    %460 = memref.load %arg3[%c6_225] : memref<8xf32, #tpu.memory_space<smem>>
    %461 = vector.broadcast %460 : f32 to vector<6x128xf32>
    %462 = arith.addf %459, %461 : vector<6x128xf32>
    %c7_226 = arith.constant 7 : index
    %c0_227 = arith.constant 0 : index
    %463 = memref.load %arg2[%c7_226, %c0_227] : memref<8x4xf32, #tpu.memory_space<smem>>
    %464 = vector.broadcast %463 : f32 to vector<6x128xf32>
    %465 = arith.mulf %464, %420 : vector<6x128xf32>
    %c7_228 = arith.constant 7 : index
    %466 = memref.load %arg3[%c7_228] : memref<8xf32, #tpu.memory_space<smem>>
    %467 = vector.broadcast %466 : f32 to vector<6x128xf32>
    %468 = arith.addf %465, %467 : vector<6x128xf32>
    %c20 = arith.constant 20 : index
    %c0_229 = arith.constant 0 : index
    %469 = vector.load %arg1[%c20, %c0_229] : memref<64x128xf32, #tpu.memory_space<vmem>>, vector<11x128xf32>
    %470 = vector.extract_strided_slice %469 {offsets = [0, 0], sizes = [1, 128], strides = [1, 1]} : vector<11x128xf32> to vector<1x128xf32>
    %471 = vector.extract_strided_slice %469 {offsets = [2, 0], sizes = [1, 128], strides = [1, 1]} : vector<11x128xf32> to vector<1x128xf32>
    %472 = vector.extract_strided_slice %469 {offsets = [4, 0], sizes = [1, 128], strides = [1, 1]} : vector<11x128xf32> to vector<1x128xf32>
    %473 = vector.extract_strided_slice %469 {offsets = [6, 0], sizes = [1, 128], strides = [1, 1]} : vector<11x128xf32> to vector<1x128xf32>
    %474 = vector.extract_strided_slice %469 {offsets = [8, 0], sizes = [1, 128], strides = [1, 1]} : vector<11x128xf32> to vector<1x128xf32>
    %475 = vector.extract_strided_slice %469 {offsets = [10, 0], sizes = [1, 128], strides = [1, 1]} : vector<11x128xf32> to vector<1x128xf32>
    %476 = tpu.concatenate %470, %471, %472, %473, %474, %475 in 0 : vector<1x128xf32>, vector<1x128xf32>, vector<1x128xf32>, vector<1x128xf32>, vector<1x128xf32>, vector<1x128xf32> -> vector<6x128xf32>
    %c0_230 = arith.constant 0 : index
    %c1_231 = arith.constant 1 : index
    %477 = memref.load %arg2[%c0_230, %c1_231] : memref<8x4xf32, #tpu.memory_space<smem>>
    %478 = vector.broadcast %477 : f32 to vector<6x128xf32>
    %479 = arith.mulf %478, %476 : vector<6x128xf32>
    %480 = arith.addf %426, %479 : vector<6x128xf32>
    %c1_232 = arith.constant 1 : index
    %c1_233 = arith.constant 1 : index
    %481 = memref.load %arg2[%c1_232, %c1_233] : memref<8x4xf32, #tpu.memory_space<smem>>
    %482 = vector.broadcast %481 : f32 to vector<6x128xf32>
    %483 = arith.mulf %482, %476 : vector<6x128xf32>
    %484 = arith.addf %432, %483 : vector<6x128xf32>
    %c2_234 = arith.constant 2 : index
    %c1_235 = arith.constant 1 : index
    %485 = memref.load %arg2[%c2_234, %c1_235] : memref<8x4xf32, #tpu.memory_space<smem>>
    %486 = vector.broadcast %485 : f32 to vector<6x128xf32>
    %487 = arith.mulf %486, %476 : vector<6x128xf32>
    %488 = arith.addf %438, %487 : vector<6x128xf32>
    %c3_236 = arith.constant 3 : index
    %c1_237 = arith.constant 1 : index
    %489 = memref.load %arg2[%c3_236, %c1_237] : memref<8x4xf32, #tpu.memory_space<smem>>
    %490 = vector.broadcast %489 : f32 to vector<6x128xf32>
    %491 = arith.mulf %490, %476 : vector<6x128xf32>
    %492 = arith.addf %444, %491 : vector<6x128xf32>
    %c4_238 = arith.constant 4 : index
    %c1_239 = arith.constant 1 : index
    %493 = memref.load %arg2[%c4_238, %c1_239] : memref<8x4xf32, #tpu.memory_space<smem>>
    %494 = vector.broadcast %493 : f32 to vector<6x128xf32>
    %495 = arith.mulf %494, %476 : vector<6x128xf32>
    %496 = arith.addf %450, %495 : vector<6x128xf32>
    %c5_240 = arith.constant 5 : index
    %c1_241 = arith.constant 1 : index
    %497 = memref.load %arg2[%c5_240, %c1_241] : memref<8x4xf32, #tpu.memory_space<smem>>
    %498 = vector.broadcast %497 : f32 to vector<6x128xf32>
    %499 = arith.mulf %498, %476 : vector<6x128xf32>
    %500 = arith.addf %456, %499 : vector<6x128xf32>
    %c6_242 = arith.constant 6 : index
    %c1_243 = arith.constant 1 : index
    %501 = memref.load %arg2[%c6_242, %c1_243] : memref<8x4xf32, #tpu.memory_space<smem>>
    %502 = vector.broadcast %501 : f32 to vector<6x128xf32>
    %503 = arith.mulf %502, %476 : vector<6x128xf32>
    %504 = arith.addf %462, %503 : vector<6x128xf32>
    %c7_244 = arith.constant 7 : index
    %c1_245 = arith.constant 1 : index
    %505 = memref.load %arg2[%c7_244, %c1_245] : memref<8x4xf32, #tpu.memory_space<smem>>
    %506 = vector.broadcast %505 : f32 to vector<6x128xf32>
    %507 = arith.mulf %506, %476 : vector<6x128xf32>
    %508 = arith.addf %468, %507 : vector<6x128xf32>
    %c36 = arith.constant 36 : index
    %c0_246 = arith.constant 0 : index
    %509 = vector.load %arg1[%c36, %c0_246] : memref<64x128xf32, #tpu.memory_space<vmem>>, vector<11x128xf32>
    %510 = vector.extract_strided_slice %509 {offsets = [0, 0], sizes = [1, 128], strides = [1, 1]} : vector<11x128xf32> to vector<1x128xf32>
    %511 = vector.extract_strided_slice %509 {offsets = [2, 0], sizes = [1, 128], strides = [1, 1]} : vector<11x128xf32> to vector<1x128xf32>
    %512 = vector.extract_strided_slice %509 {offsets = [4, 0], sizes = [1, 128], strides = [1, 1]} : vector<11x128xf32> to vector<1x128xf32>
    %513 = vector.extract_strided_slice %509 {offsets = [6, 0], sizes = [1, 128], strides = [1, 1]} : vector<11x128xf32> to vector<1x128xf32>
    %514 = vector.extract_strided_slice %509 {offsets = [8, 0], sizes = [1, 128], strides = [1, 1]} : vector<11x128xf32> to vector<1x128xf32>
    %515 = vector.extract_strided_slice %509 {offsets = [10, 0], sizes = [1, 128], strides = [1, 1]} : vector<11x128xf32> to vector<1x128xf32>
    %516 = tpu.concatenate %510, %511, %512, %513, %514, %515 in 0 : vector<1x128xf32>, vector<1x128xf32>, vector<1x128xf32>, vector<1x128xf32>, vector<1x128xf32>, vector<1x128xf32> -> vector<6x128xf32>
    %c0_247 = arith.constant 0 : index
    %c2_248 = arith.constant 2 : index
    %517 = memref.load %arg2[%c0_247, %c2_248] : memref<8x4xf32, #tpu.memory_space<smem>>
    %518 = vector.broadcast %517 : f32 to vector<6x128xf32>
    %519 = arith.mulf %518, %516 : vector<6x128xf32>
    %520 = arith.addf %480, %519 : vector<6x128xf32>
    %c1_249 = arith.constant 1 : index
    %c2_250 = arith.constant 2 : index
    %521 = memref.load %arg2[%c1_249, %c2_250] : memref<8x4xf32, #tpu.memory_space<smem>>
    %522 = vector.broadcast %521 : f32 to vector<6x128xf32>
    %523 = arith.mulf %522, %516 : vector<6x128xf32>
    %524 = arith.addf %484, %523 : vector<6x128xf32>
    %c2_251 = arith.constant 2 : index
    %c2_252 = arith.constant 2 : index
    %525 = memref.load %arg2[%c2_251, %c2_252] : memref<8x4xf32, #tpu.memory_space<smem>>
    %526 = vector.broadcast %525 : f32 to vector<6x128xf32>
    %527 = arith.mulf %526, %516 : vector<6x128xf32>
    %528 = arith.addf %488, %527 : vector<6x128xf32>
    %c3_253 = arith.constant 3 : index
    %c2_254 = arith.constant 2 : index
    %529 = memref.load %arg2[%c3_253, %c2_254] : memref<8x4xf32, #tpu.memory_space<smem>>
    %530 = vector.broadcast %529 : f32 to vector<6x128xf32>
    %531 = arith.mulf %530, %516 : vector<6x128xf32>
    %532 = arith.addf %492, %531 : vector<6x128xf32>
    %c4_255 = arith.constant 4 : index
    %c2_256 = arith.constant 2 : index
    %533 = memref.load %arg2[%c4_255, %c2_256] : memref<8x4xf32, #tpu.memory_space<smem>>
    %534 = vector.broadcast %533 : f32 to vector<6x128xf32>
    %535 = arith.mulf %534, %516 : vector<6x128xf32>
    %536 = arith.addf %496, %535 : vector<6x128xf32>
    %c5_257 = arith.constant 5 : index
    %c2_258 = arith.constant 2 : index
    %537 = memref.load %arg2[%c5_257, %c2_258] : memref<8x4xf32, #tpu.memory_space<smem>>
    %538 = vector.broadcast %537 : f32 to vector<6x128xf32>
    %539 = arith.mulf %538, %516 : vector<6x128xf32>
    %540 = arith.addf %500, %539 : vector<6x128xf32>
    %c6_259 = arith.constant 6 : index
    %c2_260 = arith.constant 2 : index
    %541 = memref.load %arg2[%c6_259, %c2_260] : memref<8x4xf32, #tpu.memory_space<smem>>
    %542 = vector.broadcast %541 : f32 to vector<6x128xf32>
    %543 = arith.mulf %542, %516 : vector<6x128xf32>
    %544 = arith.addf %504, %543 : vector<6x128xf32>
    %c7_261 = arith.constant 7 : index
    %c2_262 = arith.constant 2 : index
    %545 = memref.load %arg2[%c7_261, %c2_262] : memref<8x4xf32, #tpu.memory_space<smem>>
    %546 = vector.broadcast %545 : f32 to vector<6x128xf32>
    %547 = arith.mulf %546, %516 : vector<6x128xf32>
    %548 = arith.addf %508, %547 : vector<6x128xf32>
    %c52 = arith.constant 52 : index
    %c0_263 = arith.constant 0 : index
    %549 = vector.load %arg1[%c52, %c0_263] : memref<64x128xf32, #tpu.memory_space<vmem>>, vector<11x128xf32>
    %550 = vector.extract_strided_slice %549 {offsets = [0, 0], sizes = [1, 128], strides = [1, 1]} : vector<11x128xf32> to vector<1x128xf32>
    %551 = vector.extract_strided_slice %549 {offsets = [2, 0], sizes = [1, 128], strides = [1, 1]} : vector<11x128xf32> to vector<1x128xf32>
    %552 = vector.extract_strided_slice %549 {offsets = [4, 0], sizes = [1, 128], strides = [1, 1]} : vector<11x128xf32> to vector<1x128xf32>
    %553 = vector.extract_strided_slice %549 {offsets = [6, 0], sizes = [1, 128], strides = [1, 1]} : vector<11x128xf32> to vector<1x128xf32>
    %554 = vector.extract_strided_slice %549 {offsets = [8, 0], sizes = [1, 128], strides = [1, 1]} : vector<11x128xf32> to vector<1x128xf32>
    %555 = vector.extract_strided_slice %549 {offsets = [10, 0], sizes = [1, 128], strides = [1, 1]} : vector<11x128xf32> to vector<1x128xf32>
    %556 = tpu.concatenate %550, %551, %552, %553, %554, %555 in 0 : vector<1x128xf32>, vector<1x128xf32>, vector<1x128xf32>, vector<1x128xf32>, vector<1x128xf32>, vector<1x128xf32> -> vector<6x128xf32>
    %c0_264 = arith.constant 0 : index
    %c3_265 = arith.constant 3 : index
    %557 = memref.load %arg2[%c0_264, %c3_265] : memref<8x4xf32, #tpu.memory_space<smem>>
    %558 = vector.broadcast %557 : f32 to vector<6x128xf32>
    %559 = arith.mulf %558, %556 : vector<6x128xf32>
    %560 = arith.addf %520, %559 : vector<6x128xf32>
    %c1_266 = arith.constant 1 : index
    %c3_267 = arith.constant 3 : index
    %561 = memref.load %arg2[%c1_266, %c3_267] : memref<8x4xf32, #tpu.memory_space<smem>>
    %562 = vector.broadcast %561 : f32 to vector<6x128xf32>
    %563 = arith.mulf %562, %556 : vector<6x128xf32>
    %564 = arith.addf %524, %563 : vector<6x128xf32>
    %c2_268 = arith.constant 2 : index
    %c3_269 = arith.constant 3 : index
    %565 = memref.load %arg2[%c2_268, %c3_269] : memref<8x4xf32, #tpu.memory_space<smem>>
    %566 = vector.broadcast %565 : f32 to vector<6x128xf32>
    %567 = arith.mulf %566, %556 : vector<6x128xf32>
    %568 = arith.addf %528, %567 : vector<6x128xf32>
    %c3_270 = arith.constant 3 : index
    %c3_271 = arith.constant 3 : index
    %569 = memref.load %arg2[%c3_270, %c3_271] : memref<8x4xf32, #tpu.memory_space<smem>>
    %570 = vector.broadcast %569 : f32 to vector<6x128xf32>
    %571 = arith.mulf %570, %556 : vector<6x128xf32>
    %572 = arith.addf %532, %571 : vector<6x128xf32>
    %c4_272 = arith.constant 4 : index
    %c3_273 = arith.constant 3 : index
    %573 = memref.load %arg2[%c4_272, %c3_273] : memref<8x4xf32, #tpu.memory_space<smem>>
    %574 = vector.broadcast %573 : f32 to vector<6x128xf32>
    %575 = arith.mulf %574, %556 : vector<6x128xf32>
    %576 = arith.addf %536, %575 : vector<6x128xf32>
    %c5_274 = arith.constant 5 : index
    %c3_275 = arith.constant 3 : index
    %577 = memref.load %arg2[%c5_274, %c3_275] : memref<8x4xf32, #tpu.memory_space<smem>>
    %578 = vector.broadcast %577 : f32 to vector<6x128xf32>
    %579 = arith.mulf %578, %556 : vector<6x128xf32>
    %580 = arith.addf %540, %579 : vector<6x128xf32>
    %c6_276 = arith.constant 6 : index
    %c3_277 = arith.constant 3 : index
    %581 = memref.load %arg2[%c6_276, %c3_277] : memref<8x4xf32, #tpu.memory_space<smem>>
    %582 = vector.broadcast %581 : f32 to vector<6x128xf32>
    %583 = arith.mulf %582, %556 : vector<6x128xf32>
    %584 = arith.addf %544, %583 : vector<6x128xf32>
    %c7_278 = arith.constant 7 : index
    %c3_279 = arith.constant 3 : index
    %585 = memref.load %arg2[%c7_278, %c3_279] : memref<8x4xf32, #tpu.memory_space<smem>>
    %586 = vector.broadcast %585 : f32 to vector<6x128xf32>
    %587 = arith.mulf %586, %556 : vector<6x128xf32>
    %588 = arith.addf %548, %587 : vector<6x128xf32>
    %589 = vector.extract_strided_slice %384 {offsets = [0, 0], sizes = [12, 128], strides = [1, 1]} : vector<14x128xf32> to vector<12x128xf32>
    %590 = vector.extract_strided_slice %384 {offsets = [1, 0], sizes = [12, 128], strides = [1, 1]} : vector<14x128xf32> to vector<12x128xf32>
    %591 = arith.maximumf %589, %590 : vector<12x128xf32>
    %592 = vector.extract_strided_slice %384 {offsets = [2, 0], sizes = [12, 128], strides = [1, 1]} : vector<14x128xf32> to vector<12x128xf32>
    %593 = arith.maximumf %591, %592 : vector<12x128xf32>
    %594 = vector.extract_strided_slice %593 {offsets = [0, 0], sizes = [1, 128], strides = [1, 1]} : vector<12x128xf32> to vector<1x128xf32>
    %595 = vector.extract_strided_slice %593 {offsets = [2, 0], sizes = [1, 128], strides = [1, 1]} : vector<12x128xf32> to vector<1x128xf32>
    %596 = vector.extract_strided_slice %593 {offsets = [4, 0], sizes = [1, 128], strides = [1, 1]} : vector<12x128xf32> to vector<1x128xf32>
    %597 = vector.extract_strided_slice %593 {offsets = [6, 0], sizes = [1, 128], strides = [1, 1]} : vector<12x128xf32> to vector<1x128xf32>
    %598 = vector.extract_strided_slice %593 {offsets = [8, 0], sizes = [1, 128], strides = [1, 1]} : vector<12x128xf32> to vector<1x128xf32>
    %599 = vector.extract_strided_slice %593 {offsets = [10, 0], sizes = [1, 128], strides = [1, 1]} : vector<12x128xf32> to vector<1x128xf32>
    %600 = tpu.concatenate %594, %595, %596, %597, %598, %599 in 0 : vector<1x128xf32>, vector<1x128xf32>, vector<1x128xf32>, vector<1x128xf32>, vector<1x128xf32>, vector<1x128xf32> -> vector<6x128xf32>
    %601 = arith.addf %600, %560 : vector<6x128xf32>
    %cst_280 = arith.constant 0.000000e+00 : f32
    %602 = vector.broadcast %cst_280 : f32 to vector<6x128xf32>
    %603 = arith.maximumf %601, %602 : vector<6x128xf32>
    %604 = tpu.concatenate %603, %0 in 0 : vector<6x128xf32>, vector<2x128xf32> -> vector<8x128xf32>
    %c0_281 = arith.constant 0 : index
    %c0_282 = arith.constant 0 : index
    %605 = vector.load %arg6[%c0_281, %c0_282] : memref<64x128xf32, #tpu.memory_space<vmem>>, vector<8x128xf32>
    tpu.vector_store %arg6[%c0_281, %c0_282], %604 {strides = array<i32>} : memref<64x128xf32, #tpu.memory_space<vmem>>, vector<8x128xf32>,
    %606 = vector.extract_strided_slice %388 {offsets = [0, 0], sizes = [12, 128], strides = [1, 1]} : vector<14x128xf32> to vector<12x128xf32>
    %607 = vector.extract_strided_slice %388 {offsets = [1, 0], sizes = [12, 128], strides = [1, 1]} : vector<14x128xf32> to vector<12x128xf32>
    %608 = arith.maximumf %606, %607 : vector<12x128xf32>
    %609 = vector.extract_strided_slice %388 {offsets = [2, 0], sizes = [12, 128], strides = [1, 1]} : vector<14x128xf32> to vector<12x128xf32>
    %610 = arith.maximumf %608, %609 : vector<12x128xf32>
    %611 = vector.extract_strided_slice %610 {offsets = [0, 0], sizes = [1, 128], strides = [1, 1]} : vector<12x128xf32> to vector<1x128xf32>
    %612 = vector.extract_strided_slice %610 {offsets = [2, 0], sizes = [1, 128], strides = [1, 1]} : vector<12x128xf32> to vector<1x128xf32>
    %613 = vector.extract_strided_slice %610 {offsets = [4, 0], sizes = [1, 128], strides = [1, 1]} : vector<12x128xf32> to vector<1x128xf32>
    %614 = vector.extract_strided_slice %610 {offsets = [6, 0], sizes = [1, 128], strides = [1, 1]} : vector<12x128xf32> to vector<1x128xf32>
    %615 = vector.extract_strided_slice %610 {offsets = [8, 0], sizes = [1, 128], strides = [1, 1]} : vector<12x128xf32> to vector<1x128xf32>
    %616 = vector.extract_strided_slice %610 {offsets = [10, 0], sizes = [1, 128], strides = [1, 1]} : vector<12x128xf32> to vector<1x128xf32>
    %617 = tpu.concatenate %611, %612, %613, %614, %615, %616 in 0 : vector<1x128xf32>, vector<1x128xf32>, vector<1x128xf32>, vector<1x128xf32>, vector<1x128xf32>, vector<1x128xf32> -> vector<6x128xf32>
    %618 = arith.addf %617, %564 : vector<6x128xf32>
    %cst_283 = arith.constant 0.000000e+00 : f32
    %619 = vector.broadcast %cst_283 : f32 to vector<6x128xf32>
    %620 = arith.maximumf %618, %619 : vector<6x128xf32>
    %621 = tpu.concatenate %620, %0 in 0 : vector<6x128xf32>, vector<2x128xf32> -> vector<8x128xf32>
    %c8_284 = arith.constant 8 : index
    %c0_285 = arith.constant 0 : index
    %622 = vector.load %arg6[%c8_284, %c0_285] : memref<64x128xf32, #tpu.memory_space<vmem>>, vector<8x128xf32>
    tpu.vector_store %arg6[%c8_284, %c0_285], %621 {strides = array<i32>} : memref<64x128xf32, #tpu.memory_space<vmem>>, vector<8x128xf32>,
    %623 = vector.extract_strided_slice %392 {offsets = [0, 0], sizes = [12, 128], strides = [1, 1]} : vector<14x128xf32> to vector<12x128xf32>
    %624 = vector.extract_strided_slice %392 {offsets = [1, 0], sizes = [12, 128], strides = [1, 1]} : vector<14x128xf32> to vector<12x128xf32>
    %625 = arith.maximumf %623, %624 : vector<12x128xf32>
    %626 = vector.extract_strided_slice %392 {offsets = [2, 0], sizes = [12, 128], strides = [1, 1]} : vector<14x128xf32> to vector<12x128xf32>
    %627 = arith.maximumf %625, %626 : vector<12x128xf32>
    %628 = vector.extract_strided_slice %627 {offsets = [0, 0], sizes = [1, 128], strides = [1, 1]} : vector<12x128xf32> to vector<1x128xf32>
    %629 = vector.extract_strided_slice %627 {offsets = [2, 0], sizes = [1, 128], strides = [1, 1]} : vector<12x128xf32> to vector<1x128xf32>
    %630 = vector.extract_strided_slice %627 {offsets = [4, 0], sizes = [1, 128], strides = [1, 1]} : vector<12x128xf32> to vector<1x128xf32>
    %631 = vector.extract_strided_slice %627 {offsets = [6, 0], sizes = [1, 128], strides = [1, 1]} : vector<12x128xf32> to vector<1x128xf32>
    %632 = vector.extract_strided_slice %627 {offsets = [8, 0], sizes = [1, 128], strides = [1, 1]} : vector<12x128xf32> to vector<1x128xf32>
    %633 = vector.extract_strided_slice %627 {offsets = [10, 0], sizes = [1, 128], strides = [1, 1]} : vector<12x128xf32> to vector<1x128xf32>
    %634 = tpu.concatenate %628, %629, %630, %631, %632, %633 in 0 : vector<1x128xf32>, vector<1x128xf32>, vector<1x128xf32>, vector<1x128xf32>, vector<1x128xf32>, vector<1x128xf32> -> vector<6x128xf32>
    %635 = arith.addf %634, %568 : vector<6x128xf32>
    %cst_286 = arith.constant 0.000000e+00 : f32
    %636 = vector.broadcast %cst_286 : f32 to vector<6x128xf32>
    %637 = arith.maximumf %635, %636 : vector<6x128xf32>
    %638 = tpu.concatenate %637, %0 in 0 : vector<6x128xf32>, vector<2x128xf32> -> vector<8x128xf32>
    %c16_287 = arith.constant 16 : index
    %c0_288 = arith.constant 0 : index
    %639 = vector.load %arg6[%c16_287, %c0_288] : memref<64x128xf32, #tpu.memory_space<vmem>>, vector<8x128xf32>
    tpu.vector_store %arg6[%c16_287, %c0_288], %638 {strides = array<i32>} : memref<64x128xf32, #tpu.memory_space<vmem>>, vector<8x128xf32>,
    %640 = vector.extract_strided_slice %396 {offsets = [0, 0], sizes = [12, 128], strides = [1, 1]} : vector<14x128xf32> to vector<12x128xf32>
    %641 = vector.extract_strided_slice %396 {offsets = [1, 0], sizes = [12, 128], strides = [1, 1]} : vector<14x128xf32> to vector<12x128xf32>
    %642 = arith.maximumf %640, %641 : vector<12x128xf32>
    %643 = vector.extract_strided_slice %396 {offsets = [2, 0], sizes = [12, 128], strides = [1, 1]} : vector<14x128xf32> to vector<12x128xf32>
    %644 = arith.maximumf %642, %643 : vector<12x128xf32>
    %645 = vector.extract_strided_slice %644 {offsets = [0, 0], sizes = [1, 128], strides = [1, 1]} : vector<12x128xf32> to vector<1x128xf32>
    %646 = vector.extract_strided_slice %644 {offsets = [2, 0], sizes = [1, 128], strides = [1, 1]} : vector<12x128xf32> to vector<1x128xf32>
    %647 = vector.extract_strided_slice %644 {offsets = [4, 0], sizes = [1, 128], strides = [1, 1]} : vector<12x128xf32> to vector<1x128xf32>
    %648 = vector.extract_strided_slice %644 {offsets = [6, 0], sizes = [1, 128], strides = [1, 1]} : vector<12x128xf32> to vector<1x128xf32>
    %649 = vector.extract_strided_slice %644 {offsets = [8, 0], sizes = [1, 128], strides = [1, 1]} : vector<12x128xf32> to vector<1x128xf32>
    %650 = vector.extract_strided_slice %644 {offsets = [10, 0], sizes = [1, 128], strides = [1, 1]} : vector<12x128xf32> to vector<1x128xf32>
    %651 = tpu.concatenate %645, %646, %647, %648, %649, %650 in 0 : vector<1x128xf32>, vector<1x128xf32>, vector<1x128xf32>, vector<1x128xf32>, vector<1x128xf32>, vector<1x128xf32> -> vector<6x128xf32>
    %652 = arith.addf %651, %572 : vector<6x128xf32>
    %cst_289 = arith.constant 0.000000e+00 : f32
    %653 = vector.broadcast %cst_289 : f32 to vector<6x128xf32>
    %654 = arith.maximumf %652, %653 : vector<6x128xf32>
    %655 = tpu.concatenate %654, %0 in 0 : vector<6x128xf32>, vector<2x128xf32> -> vector<8x128xf32>
    %c24 = arith.constant 24 : index
    %c0_290 = arith.constant 0 : index
    %656 = vector.load %arg6[%c24, %c0_290] : memref<64x128xf32, #tpu.memory_space<vmem>>, vector<8x128xf32>
    tpu.vector_store %arg6[%c24, %c0_290], %655 {strides = array<i32>} : memref<64x128xf32, #tpu.memory_space<vmem>>, vector<8x128xf32>,
    %657 = vector.extract_strided_slice %400 {offsets = [0, 0], sizes = [12, 128], strides = [1, 1]} : vector<14x128xf32> to vector<12x128xf32>
    %658 = vector.extract_strided_slice %400 {offsets = [1, 0], sizes = [12, 128], strides = [1, 1]} : vector<14x128xf32> to vector<12x128xf32>
    %659 = arith.maximumf %657, %658 : vector<12x128xf32>
    %660 = vector.extract_strided_slice %400 {offsets = [2, 0], sizes = [12, 128], strides = [1, 1]} : vector<14x128xf32> to vector<12x128xf32>
    %661 = arith.maximumf %659, %660 : vector<12x128xf32>
    %662 = vector.extract_strided_slice %661 {offsets = [0, 0], sizes = [1, 128], strides = [1, 1]} : vector<12x128xf32> to vector<1x128xf32>
    %663 = vector.extract_strided_slice %661 {offsets = [2, 0], sizes = [1, 128], strides = [1, 1]} : vector<12x128xf32> to vector<1x128xf32>
    %664 = vector.extract_strided_slice %661 {offsets = [4, 0], sizes = [1, 128], strides = [1, 1]} : vector<12x128xf32> to vector<1x128xf32>
    %665 = vector.extract_strided_slice %661 {offsets = [6, 0], sizes = [1, 128], strides = [1, 1]} : vector<12x128xf32> to vector<1x128xf32>
    %666 = vector.extract_strided_slice %661 {offsets = [8, 0], sizes = [1, 128], strides = [1, 1]} : vector<12x128xf32> to vector<1x128xf32>
    %667 = vector.extract_strided_slice %661 {offsets = [10, 0], sizes = [1, 128], strides = [1, 1]} : vector<12x128xf32> to vector<1x128xf32>
    %668 = tpu.concatenate %662, %663, %664, %665, %666, %667 in 0 : vector<1x128xf32>, vector<1x128xf32>, vector<1x128xf32>, vector<1x128xf32>, vector<1x128xf32>, vector<1x128xf32> -> vector<6x128xf32>
    %669 = arith.addf %668, %576 : vector<6x128xf32>
    %cst_291 = arith.constant 0.000000e+00 : f32
    %670 = vector.broadcast %cst_291 : f32 to vector<6x128xf32>
    %671 = arith.maximumf %669, %670 : vector<6x128xf32>
    %672 = tpu.concatenate %671, %0 in 0 : vector<6x128xf32>, vector<2x128xf32> -> vector<8x128xf32>
    %c32_292 = arith.constant 32 : index
    %c0_293 = arith.constant 0 : index
    %673 = vector.load %arg6[%c32_292, %c0_293] : memref<64x128xf32, #tpu.memory_space<vmem>>, vector<8x128xf32>
    tpu.vector_store %arg6[%c32_292, %c0_293], %672 {strides = array<i32>} : memref<64x128xf32, #tpu.memory_space<vmem>>, vector<8x128xf32>,
    %674 = vector.extract_strided_slice %404 {offsets = [0, 0], sizes = [12, 128], strides = [1, 1]} : vector<14x128xf32> to vector<12x128xf32>
    %675 = vector.extract_strided_slice %404 {offsets = [1, 0], sizes = [12, 128], strides = [1, 1]} : vector<14x128xf32> to vector<12x128xf32>
    %676 = arith.maximumf %674, %675 : vector<12x128xf32>
    %677 = vector.extract_strided_slice %404 {offsets = [2, 0], sizes = [12, 128], strides = [1, 1]} : vector<14x128xf32> to vector<12x128xf32>
    %678 = arith.maximumf %676, %677 : vector<12x128xf32>
    %679 = vector.extract_strided_slice %678 {offsets = [0, 0], sizes = [1, 128], strides = [1, 1]} : vector<12x128xf32> to vector<1x128xf32>
    %680 = vector.extract_strided_slice %678 {offsets = [2, 0], sizes = [1, 128], strides = [1, 1]} : vector<12x128xf32> to vector<1x128xf32>
    %681 = vector.extract_strided_slice %678 {offsets = [4, 0], sizes = [1, 128], strides = [1, 1]} : vector<12x128xf32> to vector<1x128xf32>
    %682 = vector.extract_strided_slice %678 {offsets = [6, 0], sizes = [1, 128], strides = [1, 1]} : vector<12x128xf32> to vector<1x128xf32>
    %683 = vector.extract_strided_slice %678 {offsets = [8, 0], sizes = [1, 128], strides = [1, 1]} : vector<12x128xf32> to vector<1x128xf32>
    %684 = vector.extract_strided_slice %678 {offsets = [10, 0], sizes = [1, 128], strides = [1, 1]} : vector<12x128xf32> to vector<1x128xf32>
    %685 = tpu.concatenate %679, %680, %681, %682, %683, %684 in 0 : vector<1x128xf32>, vector<1x128xf32>, vector<1x128xf32>, vector<1x128xf32>, vector<1x128xf32>, vector<1x128xf32> -> vector<6x128xf32>
    %686 = arith.addf %685, %580 : vector<6x128xf32>
    %cst_294 = arith.constant 0.000000e+00 : f32
    %687 = vector.broadcast %cst_294 : f32 to vector<6x128xf32>
    %688 = arith.maximumf %686, %687 : vector<6x128xf32>
    %689 = tpu.concatenate %688, %0 in 0 : vector<6x128xf32>, vector<2x128xf32> -> vector<8x128xf32>
    %c40 = arith.constant 40 : index
    %c0_295 = arith.constant 0 : index
    %690 = vector.load %arg6[%c40, %c0_295] : memref<64x128xf32, #tpu.memory_space<vmem>>, vector<8x128xf32>
    tpu.vector_store %arg6[%c40, %c0_295], %689 {strides = array<i32>} : memref<64x128xf32, #tpu.memory_space<vmem>>, vector<8x128xf32>,
    %691 = vector.extract_strided_slice %408 {offsets = [0, 0], sizes = [12, 128], strides = [1, 1]} : vector<14x128xf32> to vector<12x128xf32>
    %692 = vector.extract_strided_slice %408 {offsets = [1, 0], sizes = [12, 128], strides = [1, 1]} : vector<14x128xf32> to vector<12x128xf32>
    %693 = arith.maximumf %691, %692 : vector<12x128xf32>
    %694 = vector.extract_strided_slice %408 {offsets = [2, 0], sizes = [12, 128], strides = [1, 1]} : vector<14x128xf32> to vector<12x128xf32>
    %695 = arith.maximumf %693, %694 : vector<12x128xf32>
    %696 = vector.extract_strided_slice %695 {offsets = [0, 0], sizes = [1, 128], strides = [1, 1]} : vector<12x128xf32> to vector<1x128xf32>
    %697 = vector.extract_strided_slice %695 {offsets = [2, 0], sizes = [1, 128], strides = [1, 1]} : vector<12x128xf32> to vector<1x128xf32>
    %698 = vector.extract_strided_slice %695 {offsets = [4, 0], sizes = [1, 128], strides = [1, 1]} : vector<12x128xf32> to vector<1x128xf32>
    %699 = vector.extract_strided_slice %695 {offsets = [6, 0], sizes = [1, 128], strides = [1, 1]} : vector<12x128xf32> to vector<1x128xf32>
    %700 = vector.extract_strided_slice %695 {offsets = [8, 0], sizes = [1, 128], strides = [1, 1]} : vector<12x128xf32> to vector<1x128xf32>
    %701 = vector.extract_strided_slice %695 {offsets = [10, 0], sizes = [1, 128], strides = [1, 1]} : vector<12x128xf32> to vector<1x128xf32>
    %702 = tpu.concatenate %696, %697, %698, %699, %700, %701 in 0 : vector<1x128xf32>, vector<1x128xf32>, vector<1x128xf32>, vector<1x128xf32>, vector<1x128xf32>, vector<1x128xf32> -> vector<6x128xf32>
    %703 = arith.addf %702, %584 : vector<6x128xf32>
    %cst_296 = arith.constant 0.000000e+00 : f32
    %704 = vector.broadcast %cst_296 : f32 to vector<6x128xf32>
    %705 = arith.maximumf %703, %704 : vector<6x128xf32>
    %706 = tpu.concatenate %705, %0 in 0 : vector<6x128xf32>, vector<2x128xf32> -> vector<8x128xf32>
    %c48_297 = arith.constant 48 : index
    %c0_298 = arith.constant 0 : index
    %707 = vector.load %arg6[%c48_297, %c0_298] : memref<64x128xf32, #tpu.memory_space<vmem>>, vector<8x128xf32>
    tpu.vector_store %arg6[%c48_297, %c0_298], %706 {strides = array<i32>} : memref<64x128xf32, #tpu.memory_space<vmem>>, vector<8x128xf32>,
    %708 = vector.extract_strided_slice %412 {offsets = [0, 0], sizes = [12, 128], strides = [1, 1]} : vector<14x128xf32> to vector<12x128xf32>
    %709 = vector.extract_strided_slice %412 {offsets = [1, 0], sizes = [12, 128], strides = [1, 1]} : vector<14x128xf32> to vector<12x128xf32>
    %710 = arith.maximumf %708, %709 : vector<12x128xf32>
    %711 = vector.extract_strided_slice %412 {offsets = [2, 0], sizes = [12, 128], strides = [1, 1]} : vector<14x128xf32> to vector<12x128xf32>
    %712 = arith.maximumf %710, %711 : vector<12x128xf32>
    %713 = vector.extract_strided_slice %712 {offsets = [0, 0], sizes = [1, 128], strides = [1, 1]} : vector<12x128xf32> to vector<1x128xf32>
    %714 = vector.extract_strided_slice %712 {offsets = [2, 0], sizes = [1, 128], strides = [1, 1]} : vector<12x128xf32> to vector<1x128xf32>
    %715 = vector.extract_strided_slice %712 {offsets = [4, 0], sizes = [1, 128], strides = [1, 1]} : vector<12x128xf32> to vector<1x128xf32>
    %716 = vector.extract_strided_slice %712 {offsets = [6, 0], sizes = [1, 128], strides = [1, 1]} : vector<12x128xf32> to vector<1x128xf32>
    %717 = vector.extract_strided_slice %712 {offsets = [8, 0], sizes = [1, 128], strides = [1, 1]} : vector<12x128xf32> to vector<1x128xf32>
    %718 = vector.extract_strided_slice %712 {offsets = [10, 0], sizes = [1, 128], strides = [1, 1]} : vector<12x128xf32> to vector<1x128xf32>
    %719 = tpu.concatenate %713, %714, %715, %716, %717, %718 in 0 : vector<1x128xf32>, vector<1x128xf32>, vector<1x128xf32>, vector<1x128xf32>, vector<1x128xf32>, vector<1x128xf32> -> vector<6x128xf32>
    %720 = arith.addf %719, %588 : vector<6x128xf32>
    %cst_299 = arith.constant 0.000000e+00 : f32
    %721 = vector.broadcast %cst_299 : f32 to vector<6x128xf32>
    %722 = arith.maximumf %720, %721 : vector<6x128xf32>
    %723 = tpu.concatenate %722, %0 in 0 : vector<6x128xf32>, vector<2x128xf32> -> vector<8x128xf32>
    %c56 = arith.constant 56 : index
    %c0_300 = arith.constant 0 : index
    %724 = vector.load %arg6[%c56, %c0_300] : memref<64x128xf32, #tpu.memory_space<vmem>>, vector<8x128xf32>
    tpu.vector_store %arg6[%c56, %c0_300], %723 {strides = array<i32>} : memref<64x128xf32, #tpu.memory_space<vmem>>, vector<8x128xf32>,
    return
  }
  func.func @transform_0(%arg0: i32) -> (i32, i32) {
    %c0_i32 = arith.constant 0 : i32
    %c0_i32_0 = arith.constant 0 : i32
    return %c0_i32, %arg0 : i32, i32
  }
  func.func @transform_1(%arg0: i32) -> (i32, i32) {
    %c0_i32 = arith.constant 0 : i32
    %c0_i32_0 = arith.constant 0 : i32
    %c0_i32_1 = arith.constant 0 : i32
    return %c0_i32, %c0_i32_0 : i32, i32
  }
  func.func @transform_2(%arg0: i32) -> i32 {
    %c0_i32 = arith.constant 0 : i32
    %c0_i32_0 = arith.constant 0 : i32
    return %c0_i32 : i32
  }
  func.func @transform_3(%arg0: i32) -> (i32, i32) {
    %c0_i32 = arith.constant 0 : i32
    %c0_i32_0 = arith.constant 0 : i32
    %c0_i32_1 = arith.constant 0 : i32
    return %c0_i32, %c0_i32_0 : i32, i32
  }
  func.func @transform_4(%arg0: i32) -> i32 {
    %c0_i32 = arith.constant 0 : i32
    %c0_i32_0 = arith.constant 0 : i32
    return %c0_i32 : i32
  }
  func.func @transform_5(%arg0: i32) -> (i32, i32) {
    %c0_i32 = arith.constant 0 : i32
    %c0_i32_0 = arith.constant 0 : i32
    return %c0_i32, %arg0 : i32, i32
  }
}

</mosaic_0001>

<llo_original>
// kernel: squeeze.3
$region0: #{squeeze.3}
  %s0 = inlined_call_operand.vmem [shape: f32[8,4,3], index: 0, kind: input, shape index: {}]
  %s1 = inlined_call_operand.vmem [shape: f32[8,12], index: 1, kind: output, shape index: {}]
  $region1: #{squeeze.3} parent=0
    #allocation0 [shape = 'u8[16384]{0}', space=vmem, size = 0x4000, scoped, tag = 'scoped mem for input reshape']
    %s3 = ssub.s32 16, 1
    %s4 = scalar_lea.vmem %s0, 12
    %v5 = vld [vmem:[%s4] sm:%s3]
    %s6 = scalar_lea.vmem [#allocation0], 24
    %7 = vst [vmem:[%s6] sm:%s3] %v5
    %s8 = scalar_lea.vmem %s0, 8
    %v9 = vld [vmem:[%s8] sm:%s3]
    %s10 = scalar_lea.vmem [#allocation0], 16
    %11 = vst [vmem:[%s10] sm:%s3] %v9
    %s12 = scalar_lea.vmem %s0, 4
    %v13 = vld [vmem:[%s12] sm:%s3]
    %s14 = scalar_lea.vmem [#allocation0], 8
    %15 = vst [vmem:[%s14] sm:%s3] %v13
    %v16 = vld [vmem:[%s0] sm:%s3]
    %17 = vst [vmem:[#allocation0] sm:%s3] %v16
    %v18 = vld [vmem:[#allocation0] sm:$0x7]
    %vm19 = vcmask 64512
    %20 = vst.msk [vmem:[%s1] sm:$0x7] %vm19, %v18
    %s21 = scalar_lea.vmem [#allocation0], 8
    %v22 = vld [vmem:[%s21] sm:$0x7]
    %vm23 = vcmask 64512
    %s24 = scalar_lea.vmem %s1, 3
    %25 = vst.msk [vmem:[%s24] sm:$0x7] %vm23, %v22
    %s26 = scalar_lea.vmem [#allocation0], 16
    %v27 = vld [vmem:[%s26] sm:$0x7]
    %vm28 = vcmask 64512
    %s29 = scalar_lea.vmem %s1, 6
    %30 = vst.msk [vmem:[%s29] sm:$0x7] %vm28, %v27
    %s31 = scalar_lea.vmem [#allocation0], 24
    %v32 = vld [vmem:[%s31] sm:$0x7]
    %vm33 = vcmask 64512
    %s34 = scalar_lea.vmem %s1, 9
    %35 = vst.msk [vmem:[%s34] sm:$0x7] %vm33, %v32

// kernel: layer_block_forward.1
$region0: #{layer_block_forward.1}
  #allocation0 [shape = 'u32[]', space=smem, size = 0x4, offset = 0x4, fixed_abs, tag = 'smem constant byte address 0x4 - core index']
  #allocation1 [shape = 'u32[72,128]{1,0:T(1,128)}', space=vmem, size = 0x9000, scoped, tag = 'internal scratch']
  %s0 = inlined_call_operand.vmem [shape: f32[64,128], index: 0, kind: input, shape index: {}]
  %s1 = inlined_call_operand.vmem [shape: f32[8,4], index: 1, kind: input, shape index: {}]
  %s2 = inlined_call_operand.vmem [shape: f32[8], index: 2, kind: input, shape index: {}]
  %s3 = inlined_call_operand.vmem [shape: f32[8,12], index: 3, kind: input, shape index: {}]
  %s4 = inlined_call_operand.vmem [shape: f32[8], index: 4, kind: input, shape index: {}]
  %s5 = inlined_call_operand.vmem [shape: f32[64,128], index: 5, kind: output, shape index: {}]
  %s6 = sld [smem:[#allocation0]]
  $region46: #{layer_block_forward.1} parent=0
    _
  %s8 = ssub.s32 1, %s6
  %s9 = scalar_select 0, %s8, %s6
  $region1: #{layer_block_forward.1} parent=0
    #allocation2 [shape = 'u8[4096]{0}', space=smem, size = 0x1000, scoped, tag = 'input window, operand 1, single buffered']
    #allocation3 [shape = 's32[1]{0}', space=sflag, size = 0x4, scoped, tag = 'scoped memory for layer_block_forward.1']
    #allocation4 [shape = 'u8[512]{0}', space=smem, size = 0x200, scoped, tag = 'input window, operand 2, single buffered']
    #allocation5 [shape = 's32[1]{0}', space=sflag, size = 0x4, scoped, tag = 'scoped memory for layer_block_forward.1']
    #allocation6 [shape = 'u8[4096]{0}', space=smem, size = 0x1000, scoped, tag = 'input window, operand 3, single buffered']
    #allocation7 [shape = 'u8[512]{0}', space=smem, size = 0x200, scoped, tag = 'input window, operand 4, single buffered']
    #allocation8 [shape = 's32[1]{0}', space=sflag, size = 0x4, scoped, tag = 'scoped memory for layer_block_forward.1']
    %10 = vsyncpa [#allocation3], 0
    %11 = vsyncpa [#allocation5], 0
    %12 = vsyncpa [#allocation8], 0
    // Predicated region
    $region2: #{layer_block_forward.1} parent=1 // pred_check
      _
    $region3: #{layer_block_forward.1} parent=1 // pred_check_branch
      %14 = sbr.rel (0) target = $region5
    $region4: #{layer_block_forward.1} parent=1 // pred_region
      _
    $region5: #{layer_block_forward.1} parent=1 // pred_fallthru
      _
    // Predicated region
    $region6: #{layer_block_forward.1} parent=1 // pred_check
      _
    $region7: #{layer_block_forward.1} parent=1 // pred_check_branch
      %16 = sbr.rel (0) target = $region9
    $region8: #{layer_block_forward.1} parent=1 // pred_region
      %18 = vsyncadd [#allocation3], 0
      %s20 = sshll.u32 %s1, 4
      %s21 = int_to_ptr.vmem [resolvable:$true] %s20
      %23 = dma.vmem_to_smem %s21, 128, [#allocation2], [#allocation3]
    $region9: #{layer_block_forward.1} parent=1 // pred_fallthru
      _
    // Predicated region
    $region10: #{layer_block_forward.1} parent=1 // pred_check
      _
    $region11: #{layer_block_forward.1} parent=1 // pred_check_branch
      %25 = sbr.rel (0) target = $region13
    $region12: #{layer_block_forward.1} parent=1 // pred_region
      %27 = vsyncadd [#allocation5], 0
      %s29 = sshll.u32 %s2, 4
      %s30 = int_to_ptr.vmem [resolvable:$true] %s29
      %32 = dma.vmem_to_smem %s30, 16, [#allocation4], [#allocation5]
    $region13: #{layer_block_forward.1} parent=1 // pred_fallthru
      _
    // Predicated region
    $region14: #{layer_block_forward.1} parent=1 // pred_check
      _
    $region15: #{layer_block_forward.1} parent=1 // pred_check_branch
      %34 = sbr.rel (0) target = $region17
    $region16: #{layer_block_forward.1} parent=1 // pred_region
      %36 = vsyncadd [#allocation5], 0
      %s38 = sshll.u32 %s3, 4
      %s39 = int_to_ptr.vmem [resolvable:$true] %s38
      %41 = dma.vmem_to_smem %s39, 128, [#allocation6], [#allocation5]
    $region17: #{layer_block_forward.1} parent=1 // pred_fallthru
      _
    // Predicated region
    $region18: #{layer_block_forward.1} parent=1 // pred_check
      _
    $region19: #{layer_block_forward.1} parent=1 // pred_check_branch
      %43 = sbr.rel (0) target = $region21
    $region20: #{layer_block_forward.1} parent=1 // pred_region
      %45 = vsyncadd [#allocation8], 0
      %s47 = sshll.u32 %s4, 4
      %s48 = int_to_ptr.vmem [resolvable:$true] %s47
      %50 = dma.vmem_to_smem %s48, 16, [#allocation7], [#allocation8]
    $region21: #{layer_block_forward.1} parent=1 // pred_fallthru
      _
    // Predicated region
    $region22: #{layer_block_forward.1} parent=1 // pred_check
      _
    $region23: #{layer_block_forward.1} parent=1 // pred_check_branch
      %52 = sbr.rel (0) target = $region25
    $region24: #{layer_block_forward.1} parent=1 // pred_region
      %54 = dma.done [#allocation3], 128
    $region25: #{layer_block_forward.1} parent=1 // pred_fallthru
      _
    // Predicated region
    $region26: #{layer_block_forward.1} parent=1 // pred_check
      _
    $region27: #{layer_block_forward.1} parent=1 // pred_check_branch
      %56 = sbr.rel (0) target = $region29
    $region28: #{layer_block_forward.1} parent=1 // pred_region
      %58 = dma.done [#allocation5], 16
    $region29: #{layer_block_forward.1} parent=1 // pred_fallthru
      _
    // Predicated region
    $region30: #{layer_block_forward.1} parent=1 // pred_check
      _
    $region31: #{layer_block_forward.1} parent=1 // pred_check_branch
      %60 = sbr.rel (0) target = $region33
    $region32: #{layer_block_forward.1} parent=1 // pred_region
      %62 = dma.done [#allocation5], 128
    $region33: #{layer_block_forward.1} parent=1 // pred_fallthru
      _
    // Predicated region
    $region34: #{layer_block_forward.1} parent=1 // pred_check
      _
    $region35: #{layer_block_forward.1} parent=1 // pred_check_branch
      %64 = sbr.rel (0) target = $region37
    $region36: #{layer_block_forward.1} parent=1 // pred_region
      %66 = dma.done [#allocation8], 16
    $region37: #{layer_block_forward.1} parent=1 // pred_fallthru
      _
    %67 = sfence
    %v68 = vld [vmem:[%s0] sm:$0xff]
    %v69 = vld [vmem:[%s0 + $0x8] sm:$0x3f]
    %s70 = sld [smem:[#allocation6]]
    %v71 = vstv %s70
    %v72 = vmul.f32 %v71, %v68
    %v73 = vmul.f32 %v71, %v69
    %s74 = sld [smem:[#allocation7]]
    %v75 = vstv %s74
    %v76 = vadd.f32 %v72, %v75
    %v77 = vadd.f32 %v73, %v75
    %s78 = sld [smem:[#allocation6 + $0x80]]
    %v79 = vstv %s78
    %v80 = vmul.f32 %v79, %v68
    %v81 = vmul.f32 %v79, %v69
    %s82 = sld [smem:[#allocation7 + $0x1]]
    %v83 = vstv %s82
    %v84 = vadd.f32 %v80, %v83
    %v85 = vadd.f32 %v81, %v83
    %s86 = sld [smem:[#allocation6 + $0x100]]
    %v87 = vstv %s86
    %v88 = vmul.f32 %v87, %v68
    %v89 = vmul.f32 %v87, %v69
    %s90 = sld [smem:[#allocation7 + $0x2]]
    %v91 = vstv %s90
    %v92 = vadd.f32 %v88, %v91
    %v93 = vadd.f32 %v89, %v91
    %s94 = sld [smem:[#allocation6 + $0x180]]
    %v95 = vstv %s94
    %v96 = vmul.f32 %v95, %v68
    %v97 = vmul.f32 %v95, %v69
    %s98 = sld [smem:[#allocation7 + $0x3]]
    %v99 = vstv %s98
    %v100 = vadd.f32 %v96, %v99
    %v101 = vadd.f32 %v97, %v99
    %s102 = sld [smem:[#allocation6 + $0x200]]
    %v103 = vstv %s102
    %v104 = vmul.f32 %v103, %v68
    %v105 = vmul.f32 %v103, %v69
    %s106 = sld [smem:[#allocation7 + $0x4]]
    %v107 = vstv %s106
    %v108 = vadd.f32 %v104, %v107
    %v109 = vadd.f32 %v105, %v107
    %s110 = sld [smem:[#allocation6 + $0x280]]
    %v111 = vstv %s110
    %v112 = vmul.f32 %v111, %v68
    %v113 = vmul.f32 %v111, %v69
    %s114 = sld [smem:[#allocation7 + $0x5]]
    %v115 = vstv %s114
    %v116 = vadd.f32 %v112, %v115
    %v117 = vadd.f32 %v113, %v115
    %s118 = sld [smem:[#allocation6 + $0x300]]
    %v119 = vstv %s118
    %v120 = vmul.f32 %v119, %v68
    %v121 = vmul.f32 %v119, %v69
    %s122 = sld [smem:[#allocation7 + $0x6]]
    %v123 = vstv %s122
    %v124 = vadd.f32 %v120, %v123
    %v125 = vadd.f32 %v121, %v123
    %s126 = sld [smem:[#allocation6 + $0x380]]
    %v127 = vstv %s126
    %v128 = vmul.f32 %v127, %v68
    %v129 = vmul.f32 %v127, %v69
    %s130 = sld [smem:[#allocation7 + $0x7]]
    %v131 = vstv %s130
    %v132 = vadd.f32 %v128, %v131
    %v133 = vadd.f32 %v129, %v131
    %v134 = vld [vmem:[%s0 + $0x1] sm:$0xff]
    %v135 = vld [vmem:[%s0 + $0x9] sm:$0x3f]
    %s136 = sld [smem:[#allocation6 + $0x1]]
    %v137 = vstv %s136
    %v138 = vmul.f32 %v137, %v134
    %v139 = vmul.f32 %v137, %v135
    %v140 = vadd.f32 %v76, %v138
    %v141 = vadd.f32 %v77, %v139
    %s142 = sld [smem:[#allocation6 + $0x81]]
    %v143 = vstv %s142
    %v144 = vmul.f32 %v143, %v134
    %v145 = vmul.f32 %v143, %v135
    %v146 = vadd.f32 %v84, %v144
    %v147 = vadd.f32 %v85, %v145
    %s148 = sld [smem:[#allocation6 + $0x101]]
    %v149 = vstv %s148
    %v150 = vmul.f32 %v149, %v134
    %v151 = vmul.f32 %v149, %v135
    %v152 = vadd.f32 %v92, %v150
    %v153 = vadd.f32 %v93, %v151
    %s154 = sld [smem:[#allocation6 + $0x181]]
    %v155 = vstv %s154
    %v156 = vmul.f32 %v155, %v134
    %v157 = vmul.f32 %v155, %v135
    %v158 = vadd.f32 %v100, %v156
    %v159 = vadd.f32 %v101, %v157
    %s160 = sld [smem:[#allocation6 + $0x201]]
    %v161 = vstv %s160
    %v162 = vmul.f32 %v161, %v134
    %v163 = vmul.f32 %v161, %v135
    %v164 = vadd.f32 %v108, %v162
    %v165 = vadd.f32 %v109, %v163
    %s166 = sld [smem:[#allocation6 + $0x281]]
    %v167 = vstv %s166
    %v168 = vmul.f32 %v167, %v134
    %v169 = vmul.f32 %v167, %v135
    %v170 = vadd.f32 %v116, %v168
    %v171 = vadd.f32 %v117, %v169
    %s172 = sld [smem:[#allocation6 + $0x301]]
    %v173 = vstv %s172
    %v174 = vmul.f32 %v173, %v134
    %v175 = vmul.f32 %v173, %v135
    %v176 = vadd.f32 %v124, %v174
    %v177 = vadd.f32 %v125, %v175
    %s178 = sld [smem:[#allocation6 + $0x381]]
    %v179 = vstv %s178
    %v180 = vmul.f32 %v179, %v134
    %v181 = vmul.f32 %v179, %v135
    %v182 = vadd.f32 %v132, %v180
    %v183 = vadd.f32 %v133, %v181
    %v184 = vld [vmem:[%s0 + $0x2] sm:$0xff]
    %v185 = vld [vmem:[%s0 + $0xa] sm:$0x3f]
    %s186 = sld [smem:[#allocation6 + $0x2]]
    %v187 = vstv %s186
    %v188 = vmul.f32 %v187, %v184
    %v189 = vmul.f32 %v187, %v185
    %v190 = vadd.f32 %v140, %v188
    %v191 = vadd.f32 %v141, %v189
    %s192 = sld [smem:[#allocation6 + $0x82]]
    %v193 = vstv %s192
    %v194 = vmul.f32 %v193, %v184
    %v195 = vmul.f32 %v193, %v185
    %v196 = vadd.f32 %v146, %v194
    %v197 = vadd.f32 %v147, %v195
    %s198 = sld [smem:[#allocation6 + $0x102]]
    %v199 = vstv %s198
    %v200 = vmul.f32 %v199, %v184
    %v201 = vmul.f32 %v199, %v185
    %v202 = vadd.f32 %v152, %v200
    %v203 = vadd.f32 %v153, %v201
    %s204 = sld [smem:[#allocation6 + $0x182]]
    %v205 = vstv %s204
    %v206 = vmul.f32 %v205, %v184
    %v207 = vmul.f32 %v205, %v185
    %v208 = vadd.f32 %v158, %v206
    %v209 = vadd.f32 %v159, %v207
    %s210 = sld [smem:[#allocation6 + $0x202]]
    %v211 = vstv %s210
    %v212 = vmul.f32 %v211, %v184
    %v213 = vmul.f32 %v211, %v185
    %v214 = vadd.f32 %v164, %v212
    %v215 = vadd.f32 %v165, %v213
    %s216 = sld [smem:[#allocation6 + $0x282]]
    %v217 = vstv %s216
    %v218 = vmul.f32 %v217, %v184
    %v219 = vmul.f32 %v217, %v185
    %v220 = vadd.f32 %v170, %v218
    %v221 = vadd.f32 %v171, %v219
    %s222 = sld [smem:[#allocation6 + $0x302]]
    %v223 = vstv %s222
    %v224 = vmul.f32 %v223, %v184
    %v225 = vmul.f32 %v223, %v185
    %v226 = vadd.f32 %v176, %v224
    %v227 = vadd.f32 %v177, %v225
    %s228 = sld [smem:[#allocation6 + $0x382]]
    %v229 = vstv %s228
    %v230 = vmul.f32 %v229, %v184
    %v231 = vmul.f32 %v229, %v185
    %v232 = vadd.f32 %v182, %v230
    %v233 = vadd.f32 %v183, %v231
    %v234 = vld [vmem:[%s0 + $0x10] sm:$0xff]
    %v235 = vld [vmem:[%s0 + $0x18] sm:$0x3f]
    %s236 = sld [smem:[#allocation6 + $0x3]]
    %v237 = vstv %s236
    %v238 = vmul.f32 %v237, %v234
    %v239 = vmul.f32 %v237, %v235
    %v240 = vadd.f32 %v190, %v238
    %v241 = vadd.f32 %v191, %v239
    %s242 = sld [smem:[#allocation6 + $0x83]]
    %v243 = vstv %s242
    %v244 = vmul.f32 %v243, %v234
    %v245 = vmul.f32 %v243, %v235
    %v246 = vadd.f32 %v196, %v244
    %v247 = vadd.f32 %v197, %v245
    %s248 = sld [smem:[#allocation6 + $0x103]]
    %v249 = vstv %s248
    %v250 = vmul.f32 %v249, %v234
    %v251 = vmul.f32 %v249, %v235
    %v252 = vadd.f32 %v202, %v250
    %v253 = vadd.f32 %v203, %v251
    %s254 = sld [smem:[#allocation6 + $0x183]]
    %v255 = vstv %s254
    %v256 = vmul.f32 %v255, %v234
    %v257 = vmul.f32 %v255, %v235
    %v258 = vadd.f32 %v208, %v256
    %v259 = vadd.f32 %v209, %v257
    %s260 = sld [smem:[#allocation6 + $0x203]]
    %v261 = vstv %s260
    %v262 = vmul.f32 %v261, %v234
    %v263 = vmul.f32 %v261, %v235
    %v264 = vadd.f32 %v214, %v262
    %v265 = vadd.f32 %v215, %v263
    %s266 = sld [smem:[#allocation6 + $0x283]]
    %v267 = vstv %s266
    %v268 = vmul.f32 %v267, %v234
    %v269 = vmul.f32 %v267, %v235
    %v270 = vadd.f32 %v220, %v268
    %v271 = vadd.f32 %v221, %v269
    %s272 = sld [smem:[#allocation6 + $0x303]]
    %v273 = vstv %s272
    %v274 = vmul.f32 %v273, %v234
    %v275 = vmul.f32 %v273, %v235
    %v276 = vadd.f32 %v226, %v274
    %v277 = vadd.f32 %v227, %v275
    %s278 = sld [smem:[#allocation6 + $0x383]]
    %v279 = vstv %s278
    %v280 = vmul.f32 %v279, %v234
    %v281 = vmul.f32 %v279, %v235
    %v282 = vadd.f32 %v232, %v280
    %v283 = vadd.f32 %v233, %v281
    %v284 = vld [vmem:[%s0 + $0x11] sm:$0xff]
    %v285 = vld [vmem:[%s0 + $0x19] sm:$0x3f]
    %s286 = sld [smem:[#allocation6 + $0x4]]
    %v287 = vstv %s286
    %v288 = vmul.f32 %v287, %v284
    %v289 = vmul.f32 %v287, %v285
    %v290 = vadd.f32 %v240, %v288
    %v291 = vadd.f32 %v241, %v289
    %s292 = sld [smem:[#allocation6 + $0x84]]
    %v293 = vstv %s292
    %v294 = vmul.f32 %v293, %v284
    %v295 = vmul.f32 %v293, %v285
    %v296 = vadd.f32 %v246, %v294
    %v297 = vadd.f32 %v247, %v295
    %s298 = sld [smem:[#allocation6 + $0x104]]
    %v299 = vstv %s298
    %v300 = vmul.f32 %v299, %v284
    %v301 = vmul.f32 %v299, %v285
    %v302 = vadd.f32 %v252, %v300
    %v303 = vadd.f32 %v253, %v301
    %s304 = sld [smem:[#allocation6 + $0x184]]
    %v305 = vstv %s304
    %v306 = vmul.f32 %v305, %v284
    %v307 = vmul.f32 %v305, %v285
    %v308 = vadd.f32 %v258, %v306
    %v309 = vadd.f32 %v259, %v307
    %s310 = sld [smem:[#allocation6 + $0x204]]
    %v311 = vstv %s310
    %v312 = vmul.f32 %v311, %v284
    %v313 = vmul.f32 %v311, %v285
    %v314 = vadd.f32 %v264, %v312
    %v315 = vadd.f32 %v265, %v313
    %s316 = sld [smem:[#allocation6 + $0x284]]
    %v317 = vstv %s316
    %v318 = vmul.f32 %v317, %v284
    %v319 = vmul.f32 %v317, %v285
    %v320 = vadd.f32 %v270, %v318
    %v321 = vadd.f32 %v271, %v319
    %s322 = sld [smem:[#allocation6 + $0x304]]
    %v323 = vstv %s322
    %v324 = vmul.f32 %v323, %v284
    %v325 = vmul.f32 %v323, %v285
    %v326 = vadd.f32 %v276, %v324
    %v327 = vadd.f32 %v277, %v325
    %s328 = sld [smem:[#allocation6 + $0x384]]
    %v329 = vstv %s328
    %v330 = vmul.f32 %v329, %v284
    %v331 = vmul.f32 %v329, %v285
    %v332 = vadd.f32 %v282, %v330
    %v333 = vadd.f32 %v283, %v331
    %v334 = vld [vmem:[%s0 + $0x12] sm:$0xff]
    %v335 = vld [vmem:[%s0 + $0x1a] sm:$0x3f]
    %s336 = sld [smem:[#allocation6 + $0x5]]
    %v337 = vstv %s336
    %v338 = vmul.f32 %v337, %v334
    %v339 = vmul.f32 %v337, %v335
    %v340 = vadd.f32 %v290, %v338
    %v341 = vadd.f32 %v291, %v339
    %s342 = sld [smem:[#allocation6 + $0x85]]
    %v343 = vstv %s342
    %v344 = vmul.f32 %v343, %v334
    %v345 = vmul.f32 %v343, %v335
    %v346 = vadd.f32 %v296, %v344
    %v347 = vadd.f32 %v297, %v345
    %s348 = sld [smem:[#allocation6 + $0x105]]
    %v349 = vstv %s348
    %v350 = vmul.f32 %v349, %v334
    %v351 = vmul.f32 %v349, %v335
    %v352 = vadd.f32 %v302, %v350
    %v353 = vadd.f32 %v303, %v351
    %s354 = sld [smem:[#allocation6 + $0x185]]
    %v355 = vstv %s354
    %v356 = vmul.f32 %v355, %v334
    %v357 = vmul.f32 %v355, %v335
    %v358 = vadd.f32 %v308, %v356
    %v359 = vadd.f32 %v309, %v357
    %s360 = sld [smem:[#allocation6 + $0x205]]
    %v361 = vstv %s360
    %v362 = vmul.f32 %v361, %v334
    %v363 = vmul.f32 %v361, %v335
    %v364 = vadd.f32 %v314, %v362
    %v365 = vadd.f32 %v315, %v363
    %s366 = sld [smem:[#allocation6 + $0x285]]
    %v367 = vstv %s366
    %v368 = vmul.f32 %v367, %v334
    %v369 = vmul.f32 %v367, %v335
    %v370 = vadd.f32 %v320, %v368
    %v371 = vadd.f32 %v321, %v369
    %s372 = sld [smem:[#allocation6 + $0x305]]
    %v373 = vstv %s372
    %v374 = vmul.f32 %v373, %v334
    %v375 = vmul.f32 %v373, %v335
    %v376 = vadd.f32 %v326, %v374
    %v377 = vadd.f32 %v327, %v375
    %s378 = sld [smem:[#allocation6 + $0x385]]
    %v379 = vstv %s378
    %v380 = vmul.f32 %v379, %v334
    %v381 = vmul.f32 %v379, %v335
    %v382 = vadd.f32 %v332, %v380
    %v383 = vadd.f32 %v333, %v381
    %v384 = vld [vmem:[%s0 + $0x20] sm:$0xff]
    %v385 = vld [vmem:[%s0 + $0x28] sm:$0x3f]
    %s386 = sld [smem:[#allocation6 + $0x6]]
    %v387 = vstv %s386
    %v388 = vmul.f32 %v387, %v384
    %v389 = vmul.f32 %v387, %v385
    %v390 = vadd.f32 %v340, %v388
    %v391 = vadd.f32 %v341, %v389
    %s392 = sld [smem:[#allocation6 + $0x86]]
    %v393 = vstv %s392
    %v394 = vmul.f32 %v393, %v384
    %v395 = vmul.f32 %v393, %v385
    %v396 = vadd.f32 %v346, %v394
    %v397 = vadd.f32 %v347, %v395
    %s398 = sld [smem:[#allocation6 + $0x106]]
    %v399 = vstv %s398
    %v400 = vmul.f32 %v399, %v384
    %v401 = vmul.f32 %v399, %v385
    %v402 = vadd.f32 %v352, %v400
    %v403 = vadd.f32 %v353, %v401
    %s404 = sld [smem:[#allocation6 + $0x186]]
    %v405 = vstv %s404
    %v406 = vmul.f32 %v405, %v384
    %v407 = vmul.f32 %v405, %v385
    %v408 = vadd.f32 %v358, %v406
    %v409 = vadd.f32 %v359, %v407
    %s410 = sld [smem:[#allocation6 + $0x206]]
    %v411 = vstv %s410
    %v412 = vmul.f32 %v411, %v384
    %v413 = vmul.f32 %v411, %v385
    %v414 = vadd.f32 %v364, %v412
    %v415 = vadd.f32 %v365, %v413
    %s416 = sld [smem:[#allocation6 + $0x286]]
    %v417 = vstv %s416
    %v418 = vmul.f32 %v417, %v384
    %v419 = vmul.f32 %v417, %v385
    %v420 = vadd.f32 %v370, %v418
    %v421 = vadd.f32 %v371, %v419
    %s422 = sld [smem:[#allocation6 + $0x306]]
    %v423 = vstv %s422
    %v424 = vmul.f32 %v423, %v384
    %v425 = vmul.f32 %v423, %v385
    %v426 = vadd.f32 %v376, %v424
    %v427 = vadd.f32 %v377, %v425
    %s428 = sld [smem:[#allocation6 + $0x386]]
    %v429 = vstv %s428
    %v430 = vmul.f32 %v429, %v384
    %v431 = vmul.f32 %v429, %v385
    %v432 = vadd.f32 %v382, %v430
    %v433 = vadd.f32 %v383, %v431
    %v434 = vld [vmem:[%s0 + $0x21] sm:$0xff]
    %v435 = vld [vmem:[%s0 + $0x29] sm:$0x3f]
    %s436 = sld [smem:[#allocation6 + $0x7]]
    %v437 = vstv %s436
    %v438 = vmul.f32 %v437, %v434
    %v439 = vmul.f32 %v437, %v435
    %v440 = vadd.f32 %v390, %v438
    %v441 = vadd.f32 %v391, %v439
    %s442 = sld [smem:[#allocation6 + $0x87]]
    %v443 = vstv %s442
    %v444 = vmul.f32 %v443, %v434
    %v445 = vmul.f32 %v443, %v435
    %v446 = vadd.f32 %v396, %v444
    %v447 = vadd.f32 %v397, %v445
    %s448 = sld [smem:[#allocation6 + $0x107]]
    %v449 = vstv %s448
    %v450 = vmul.f32 %v449, %v434
    %v451 = vmul.f32 %v449, %v435
    %v452 = vadd.f32 %v402, %v450
    %v453 = vadd.f32 %v403, %v451
    %s454 = sld [smem:[#allocation6 + $0x187]]
    %v455 = vstv %s454
    %v456 = vmul.f32 %v455, %v434
    %v457 = vmul.f32 %v455, %v435
    %v458 = vadd.f32 %v408, %v456
    %v459 = vadd.f32 %v409, %v457
    %s460 = sld [smem:[#allocation6 + $0x207]]
    %v461 = vstv %s460
    %v462 = vmul.f32 %v461, %v434
    %v463 = vmul.f32 %v461, %v435
    %v464 = vadd.f32 %v414, %v462
    %v465 = vadd.f32 %v415, %v463
    %s466 = sld [smem:[#allocation6 + $0x287]]
    %v467 = vstv %s466
    %v468 = vmul.f32 %v467, %v434
    %v469 = vmul.f32 %v467, %v435
    %v470 = vadd.f32 %v420, %v468
    %v471 = vadd.f32 %v421, %v469
    %s472 = sld [smem:[#allocation6 + $0x307]]
    %v473 = vstv %s472
    %v474 = vmul.f32 %v473, %v434
    %v475 = vmul.f32 %v473, %v435
    %v476 = vadd.f32 %v426, %v474
    %v477 = vadd.f32 %v427, %v475
    %s478 = sld [smem:[#allocation6 + $0x387]]
    %v479 = vstv %s478
    %v480 = vmul.f32 %v479, %v434
    %v481 = vmul.f32 %v479, %v435
    %v482 = vadd.f32 %v432, %v480
    %v483 = vadd.f32 %v433, %v481
    %v484 = vld [vmem:[%s0 + $0x22] sm:$0xff]
    %v485 = vld [vmem:[%s0 + $0x2a] sm:$0x3f]
    %s486 = sld [smem:[#allocation6 + $0x8]]
    %v487 = vstv %s486
    %v488 = vmul.f32 %v487, %v484
    %v489 = vmul.f32 %v487, %v485
    %v490 = vadd.f32 %v440, %v488
    %v491 = vadd.f32 %v441, %v489
    %s492 = sld [smem:[#allocation6 + $0x88]]
    %v493 = vstv %s492
    %v494 = vmul.f32 %v493, %v484
    %v495 = vmul.f32 %v493, %v485
    %v496 = vadd.f32 %v446, %v494
    %v497 = vadd.f32 %v447, %v495
    %s498 = sld [smem:[#allocation6 + $0x108]]
    %v499 = vstv %s498
    %v500 = vmul.f32 %v499, %v484
    %v501 = vmul.f32 %v499, %v485
    %v502 = vadd.f32 %v452, %v500
    %v503 = vadd.f32 %v453, %v501
    %s504 = sld [smem:[#allocation6 + $0x188]]
    %v505 = vstv %s504
    %v506 = vmul.f32 %v505, %v484
    %v507 = vmul.f32 %v505, %v485
    %v508 = vadd.f32 %v458, %v506
    %v509 = vadd.f32 %v459, %v507
    %s510 = sld [smem:[#allocation6 + $0x208]]
    %v511 = vstv %s510
    %v512 = vmul.f32 %v511, %v484
    %v513 = vmul.f32 %v511, %v485
    %v514 = vadd.f32 %v464, %v512
    %v515 = vadd.f32 %v465, %v513
    %s516 = sld [smem:[#allocation6 + $0x288]]
    %v517 = vstv %s516
    %v518 = vmul.f32 %v517, %v484
    %v519 = vmul.f32 %v517, %v485
    %v520 = vadd.f32 %v470, %v518
    %v521 = vadd.f32 %v471, %v519
    %s522 = sld [smem:[#allocation6 + $0x308]]
    %v523 = vstv %s522
    %v524 = vmul.f32 %v523, %v484
    %v525 = vmul.f32 %v523, %v485
    %v526 = vadd.f32 %v476, %v524
    %v527 = vadd.f32 %v477, %v525
    %s528 = sld [smem:[#allocation6 + $0x388]]
    %v529 = vstv %s528
    %v530 = vmul.f32 %v529, %v484
    %v531 = vmul.f32 %v529, %v485
    %v532 = vadd.f32 %v482, %v530
    %v533 = vadd.f32 %v483, %v531
    %v534 = vld [vmem:[%s0 + $0x30] sm:$0xff]
    %v535 = vld [vmem:[%s0 + $0x38] sm:$0x3f]
    %s536 = sld [smem:[#allocation6 + $0x9]]
    %v537 = vstv %s536
    %v538 = vmul.f32 %v537, %v534
    %v539 = vmul.f32 %v537, %v535
    %v540 = vadd.f32 %v490, %v538
    %v541 = vadd.f32 %v491, %v539
    %s542 = sld [smem:[#allocation6 + $0x89]]
    %v543 = vstv %s542
    %v544 = vmul.f32 %v543, %v534
    %v545 = vmul.f32 %v543, %v535
    %v546 = vadd.f32 %v496, %v544
    %v547 = vadd.f32 %v497, %v545
    %s548 = sld [smem:[#allocation6 + $0x109]]
    %v549 = vstv %s548
    %v550 = vmul.f32 %v549, %v534
    %v551 = vmul.f32 %v549, %v535
    %v552 = vadd.f32 %v502, %v550
    %v553 = vadd.f32 %v503, %v551
    %s554 = sld [smem:[#allocation6 + $0x189]]
    %v555 = vstv %s554
    %v556 = vmul.f32 %v555, %v534
    %v557 = vmul.f32 %v555, %v535
    %v558 = vadd.f32 %v508, %v556
    %v559 = vadd.f32 %v509, %v557
    %s560 = sld [smem:[#allocation6 + $0x209]]
    %v561 = vstv %s560
    %v562 = vmul.f32 %v561, %v534
    %v563 = vmul.f32 %v561, %v535
    %v564 = vadd.f32 %v514, %v562
    %v565 = vadd.f32 %v515, %v563
    %s566 = sld [smem:[#allocation6 + $0x289]]
    %v567 = vstv %s566
    %v568 = vmul.f32 %v567, %v534
    %v569 = vmul.f32 %v567, %v535
    %v570 = vadd.f32 %v520, %v568
    %v571 = vadd.f32 %v521, %v569
    %s572 = sld [smem:[#allocation6 + $0x309]]
    %v573 = vstv %s572
    %v574 = vmul.f32 %v573, %v534
    %v575 = vmul.f32 %v573, %v535
    %v576 = vadd.f32 %v526, %v574
    %v577 = vadd.f32 %v527, %v575
    %s578 = sld [smem:[#allocation6 + $0x389]]
    %v579 = vstv %s578
    %v580 = vmul.f32 %v579, %v534
    %v581 = vmul.f32 %v579, %v535
    %v582 = vadd.f32 %v532, %v580
    %v583 = vadd.f32 %v533, %v581
    %v584 = vld [vmem:[%s0 + $0x31] sm:$0xff]
    %v585 = vld [vmem:[%s0 + $0x39] sm:$0x3f]
    %s586 = sld [smem:[#allocation6 + $0xa]]
    %v587 = vstv %s586
    %v588 = vmul.f32 %v587, %v584
    %v589 = vmul.f32 %v587, %v585
    %v590 = vadd.f32 %v540, %v588
    %v591 = vadd.f32 %v541, %v589
    %s592 = sld [smem:[#allocation6 + $0x8a]]
    %v593 = vstv %s592
    %v594 = vmul.f32 %v593, %v584
    %v595 = vmul.f32 %v593, %v585
    %v596 = vadd.f32 %v546, %v594
    %v597 = vadd.f32 %v547, %v595
    %s598 = sld [smem:[#allocation6 + $0x10a]]
    %v599 = vstv %s598
    %v600 = vmul.f32 %v599, %v584
    %v601 = vmul.f32 %v599, %v585
    %v602 = vadd.f32 %v552, %v600
    %v603 = vadd.f32 %v553, %v601
    %s604 = sld [smem:[#allocation6 + $0x18a]]
    %v605 = vstv %s604
    %v606 = vmul.f32 %v605, %v584
    %v607 = vmul.f32 %v605, %v585
    %v608 = vadd.f32 %v558, %v606
    %v609 = vadd.f32 %v559, %v607
    %s610 = sld [smem:[#allocation6 + $0x20a]]
    %v611 = vstv %s610
    %v612 = vmul.f32 %v611, %v584
    %v613 = vmul.f32 %v611, %v585
    %v614 = vadd.f32 %v564, %v612
    %v615 = vadd.f32 %v565, %v613
    %s616 = sld [smem:[#allocation6 + $0x28a]]
    %v617 = vstv %s616
    %v618 = vmul.f32 %v617, %v584
    %v619 = vmul.f32 %v617, %v585
    %v620 = vadd.f32 %v570, %v618
    %v621 = vadd.f32 %v571, %v619
    %s622 = sld [smem:[#allocation6 + $0x30a]]
    %v623 = vstv %s622
    %v624 = vmul.f32 %v623, %v584
    %v625 = vmul.f32 %v623, %v585
    %v626 = vadd.f32 %v576, %v624
    %v627 = vadd.f32 %v577, %v625
    %s628 = sld [smem:[#allocation6 + $0x38a]]
    %v629 = vstv %s628
    %v630 = vmul.f32 %v629, %v584
    %v631 = vmul.f32 %v629, %v585
    %v632 = vadd.f32 %v582, %v630
    %v633 = vadd.f32 %v583, %v631
    %v634 = vld [vmem:[%s0 + $0x32] sm:$0xff]
    %v635 = vld [vmem:[%s0 + $0x3a] sm:$0x3f]
    %s636 = sld [smem:[#allocation6 + $0xb]]
    %v637 = vstv %s636
    %v638 = vmul.f32 %v637, %v634
    %v639 = vmul.f32 %v637, %v635
    %v640 = vadd.f32 %v590, %v638
    %v641 = vadd.f32 %v591, %v639
    %s642 = sld [smem:[#allocation6 + $0x8b]]
    %v643 = vstv %s642
    %v644 = vmul.f32 %v643, %v634
    %v645 = vmul.f32 %v643, %v635
    %v646 = vadd.f32 %v596, %v644
    %v647 = vadd.f32 %v597, %v645
    %s648 = sld [smem:[#allocation6 + $0x10b]]
    %v649 = vstv %s648
    %v650 = vmul.f32 %v649, %v634
    %v651 = vmul.f32 %v649, %v635
    %v652 = vadd.f32 %v602, %v650
    %v653 = vadd.f32 %v603, %v651
    %s654 = sld [smem:[#allocation6 + $0x18b]]
    %v655 = vstv %s654
    %v656 = vmul.f32 %v655, %v634
    %v657 = vmul.f32 %v655, %v635
    %v658 = vadd.f32 %v608, %v656
    %v659 = vadd.f32 %v609, %v657
    %s660 = sld [smem:[#allocation6 + $0x20b]]
    %v661 = vstv %s660
    %v662 = vmul.f32 %v661, %v634
    %v663 = vmul.f32 %v661, %v635
    %v664 = vadd.f32 %v614, %v662
    %v665 = vadd.f32 %v615, %v663
    %s666 = sld [smem:[#allocation6 + $0x28b]]
    %v667 = vstv %s666
    %v668 = vmul.f32 %v667, %v634
    %v669 = vmul.f32 %v667, %v635
    %v670 = vadd.f32 %v620, %v668
    %v671 = vadd.f32 %v621, %v669
    %s672 = sld [smem:[#allocation6 + $0x30b]]
    %v673 = vstv %s672
    %v674 = vmul.f32 %v673, %v634
    %v675 = vmul.f32 %v673, %v635
    %v676 = vadd.f32 %v626, %v674
    %v677 = vadd.f32 %v627, %v675
    %s678 = sld [smem:[#allocation6 + $0x38b]]
    %v679 = vstv %s678
    %v680 = vmul.f32 %v679, %v634
    %v681 = vmul.f32 %v679, %v635
    %v682 = vadd.f32 %v632, %v680
    %v683 = vadd.f32 %v633, %v681
    %v684 = vld [vmem:[%s0 + $0x4] sm:$0xff]
    %v685 = vld [vmem:[%s0 + $0xc] sm:$0x7]
    %v687 = vrot.slane %v684, 1
    %v689 = vrot.slane %v684, 2
    %v691 = vrot.slane %v684, 3
    %v694 = vrot.slane %v685, 4
    %v696 = vrot.slane %v685, 5
    %vm698 = vcmask 1040384
    %v699 = vsel %vm698, %v684, %v687
    %vm700 = vcmask 1041408
    %v701 = vsel %vm700, %v699, %v689
    %vm702 = vcmask 1042432
    %v703 = vsel %vm702, %v701, %v691
    %vm704 = vcmask 1043456
    %v705 = vsel %vm704, %v703, %v694
    %vm706 = vcmask 1044480
    %v707 = vsel %vm706, %v705, %v696
    %s708 = sld [smem:[#allocation2]]
    %v709 = vstv %s708
    %v710 = vmul.f32 %v709, %v707
    %s711 = sld [smem:[#allocation4]]
    %v712 = vstv %s711
    %v713 = vadd.f32 %v710, %v712
    %s714 = sld [smem:[#allocation2 + $0x80]]
    %v715 = vstv %s714
    %v716 = vmul.f32 %v715, %v707
    %s717 = sld [smem:[#allocation4 + $0x1]]
    %v718 = vstv %s717
    %v719 = vadd.f32 %v716, %v718
    %s720 = sld [smem:[#allocation2 + $0x100]]
    %v721 = vstv %s720
    %v722 = vmul.f32 %v721, %v707
    %s723 = sld [smem:[#allocation4 + $0x2]]
    %v724 = vstv %s723
    %v725 = vadd.f32 %v722, %v724
    %s726 = sld [smem:[#allocation2 + $0x180]]
    %v727 = vstv %s726
    %v728 = vmul.f32 %v727, %v707
    %s729 = sld [smem:[#allocation4 + $0x3]]
    %v730 = vstv %s729
    %v731 = vadd.f32 %v728, %v730
    %s732 = sld [smem:[#allocation2 + $0x200]]
    %v733 = vstv %s732
    %v734 = vmul.f32 %v733, %v707
    %s735 = sld [smem:[#allocation4 + $0x4]]
    %v736 = vstv %s735
    %v737 = vadd.f32 %v734, %v736
    %s738 = sld [smem:[#allocation2 + $0x280]]
    %v739 = vstv %s738
    %v740 = vmul.f32 %v739, %v707
    %s741 = sld [smem:[#allocation4 + $0x5]]
    %v742 = vstv %s741
    %v743 = vadd.f32 %v740, %v742
    %s744 = sld [smem:[#allocation2 + $0x300]]
    %v745 = vstv %s744
    %v746 = vmul.f32 %v745, %v707
    %s747 = sld [smem:[#allocation4 + $0x6]]
    %v748 = vstv %s747
    %v749 = vadd.f32 %v746, %v748
    %s750 = sld [smem:[#allocation2 + $0x380]]
    %v751 = vstv %s750
    %v752 = vmul.f32 %v751, %v707
    %s753 = sld [smem:[#allocation4 + $0x7]]
    %v754 = vstv %s753
    %v755 = vadd.f32 %v752, %v754
    %v756 = vld [vmem:[%s0 + $0x14] sm:$0xff]
    %v757 = vld [vmem:[%s0 + $0x1c] sm:$0x7]
    %v759 = vrot.slane %v756, 1
    %v761 = vrot.slane %v756, 2
    %v763 = vrot.slane %v756, 3
    %v766 = vrot.slane %v757, 4
    %v768 = vrot.slane %v757, 5
    %v770 = vsel %vm698, %v756, %v759
    %v771 = vsel %vm700, %v770, %v761
    %v772 = vsel %vm702, %v771, %v763
    %v773 = vsel %vm704, %v772, %v766
    %v774 = vsel %vm706, %v773, %v768
    %s775 = sld [smem:[#allocation2 + $0x1]]
    %v776 = vstv %s775
    %v777 = vmul.f32 %v776, %v774
    %v778 = vadd.f32 %v713, %v777
    %s779 = sld [smem:[#allocation2 + $0x81]]
    %v780 = vstv %s779
    %v781 = vmul.f32 %v780, %v774
    %v782 = vadd.f32 %v719, %v781
    %s783 = sld [smem:[#allocation2 + $0x101]]
    %v784 = vstv %s783
    %v785 = vmul.f32 %v784, %v774
    %v786 = vadd.f32 %v725, %v785
    %s787 = sld [smem:[#allocation2 + $0x181]]
    %v788 = vstv %s787
    %v789 = vmul.f32 %v788, %v774
    %v790 = vadd.f32 %v731, %v789
    %s791 = sld [smem:[#allocation2 + $0x201]]
    %v792 = vstv %s791
    %v793 = vmul.f32 %v792, %v774
    %v794 = vadd.f32 %v737, %v793
    %s795 = sld [smem:[#allocation2 + $0x281]]
    %v796 = vstv %s795
    %v797 = vmul.f32 %v796, %v774
    %v798 = vadd.f32 %v743, %v797
    %s799 = sld [smem:[#allocation2 + $0x301]]
    %v800 = vstv %s799
    %v801 = vmul.f32 %v800, %v774
    %v802 = vadd.f32 %v749, %v801
    %s803 = sld [smem:[#allocation2 + $0x381]]
    %v804 = vstv %s803
    %v805 = vmul.f32 %v804, %v774
    %v806 = vadd.f32 %v755, %v805
    %v807 = vld [vmem:[%s0 + $0x24] sm:$0xff]
    %v808 = vld [vmem:[%s0 + $0x2c] sm:$0x7]
    %v810 = vrot.slane %v807, 1
    %v812 = vrot.slane %v807, 2
    %v814 = vrot.slane %v807, 3
    %v817 = vrot.slane %v808, 4
    %v819 = vrot.slane %v808, 5
    %v821 = vsel %vm698, %v807, %v810
    %v822 = vsel %vm700, %v821, %v812
    %v823 = vsel %vm702, %v822, %v814
    %v824 = vsel %vm704, %v823, %v817
    %v825 = vsel %vm706, %v824, %v819
    %s826 = sld [smem:[#allocation2 + $0x2]]
    %v827 = vstv %s826
    %v828 = vmul.f32 %v827, %v825
    %v829 = vadd.f32 %v778, %v828
    %s830 = sld [smem:[#allocation2 + $0x82]]
    %v831 = vstv %s830
    %v832 = vmul.f32 %v831, %v825
    %v833 = vadd.f32 %v782, %v832
    %s834 = sld [smem:[#allocation2 + $0x102]]
    %v835 = vstv %s834
    %v836 = vmul.f32 %v835, %v825
    %v837 = vadd.f32 %v786, %v836
    %s838 = sld [smem:[#allocation2 + $0x182]]
    %v839 = vstv %s838
    %v840 = vmul.f32 %v839, %v825
    %v841 = vadd.f32 %v790, %v840
    %s842 = sld [smem:[#allocation2 + $0x202]]
    %v843 = vstv %s842
    %v844 = vmul.f32 %v843, %v825
    %v845 = vadd.f32 %v794, %v844
    %s846 = sld [smem:[#allocation2 + $0x282]]
    %v847 = vstv %s846
    %v848 = vmul.f32 %v847, %v825
    %v849 = vadd.f32 %v798, %v848
    %s850 = sld [smem:[#allocation2 + $0x302]]
    %v851 = vstv %s850
    %v852 = vmul.f32 %v851, %v825
    %v853 = vadd.f32 %v802, %v852
    %s854 = sld [smem:[#allocation2 + $0x382]]
    %v855 = vstv %s854
    %v856 = vmul.f32 %v855, %v825
    %v857 = vadd.f32 %v806, %v856
    %v858 = vld [vmem:[%s0 + $0x34] sm:$0xff]
    %v859 = vld [vmem:[%s0 + $0x3c] sm:$0x7]
    %v861 = vrot.slane %v858, 1
    %v863 = vrot.slane %v858, 2
    %v865 = vrot.slane %v858, 3
    %v868 = vrot.slane %v859, 4
    %v870 = vrot.slane %v859, 5
    %v872 = vsel %vm698, %v858, %v861
    %v873 = vsel %vm700, %v872, %v863
    %v874 = vsel %vm702, %v873, %v865
    %v875 = vsel %vm704, %v874, %v868
    %v876 = vsel %vm706, %v875, %v870
    %s877 = sld [smem:[#allocation2 + $0x3]]
    %v878 = vstv %s877
    %v879 = vmul.f32 %v878, %v876
    %v880 = vadd.f32 %v829, %v879
    %s881 = sld [smem:[#allocation2 + $0x83]]
    %v882 = vstv %s881
    %v883 = vmul.f32 %v882, %v876
    %v884 = vadd.f32 %v833, %v883
    %s885 = sld [smem:[#allocation2 + $0x103]]
    %v886 = vstv %s885
    %v887 = vmul.f32 %v886, %v876
    %v888 = vadd.f32 %v837, %v887
    %s889 = sld [smem:[#allocation2 + $0x183]]
    %v890 = vstv %s889
    %v891 = vmul.f32 %v890, %v876
    %v892 = vadd.f32 %v841, %v891
    %s893 = sld [smem:[#allocation2 + $0x203]]
    %v894 = vstv %s893
    %v895 = vmul.f32 %v894, %v876
    %v896 = vadd.f32 %v845, %v895
    %s897 = sld [smem:[#allocation2 + $0x283]]
    %v898 = vstv %s897
    %v899 = vmul.f32 %v898, %v876
    %v900 = vadd.f32 %v849, %v899
    %s901 = sld [smem:[#allocation2 + $0x303]]
    %v902 = vstv %s901
    %v903 = vmul.f32 %v902, %v876
    %v904 = vadd.f32 %v853, %v903
    %s905 = sld [smem:[#allocation2 + $0x383]]
    %v906 = vstv %s905
    %v907 = vmul.f32 %v906, %v876
    %v908 = vadd.f32 %v857, %v907
    %vm911 = vcmask 1046528
    %v912 = vrot.slane %v640, 1
    %v913 = vrot.slane %v641, 1
    %v914 = vsel %vm911, %v912, %v913
    %v917 = vmax.f32 %v640, %v914
    %v918 = vmax.f32 %v641, %v913
    %vm919 = vcmask 1045504
    %v920 = vrot.slane %v640, 2
    %v921 = vrot.slane %v641, 2
    %v922 = vsel %vm919, %v920, %v921
    %v925 = vmax.f32 %v917, %v922
    %v926 = vmax.f32 %v918, %v921
    %v928 = vrot.slane %v925, 1
    %v930 = vrot.slane %v925, 2
    %v932 = vrot.slane %v925, 3
    %v935 = vrot.slane %v926, 4
    %v937 = vrot.slane %v926, 5
    %v939 = vsel %vm698, %v925, %v928
    %v940 = vsel %vm700, %v939, %v930
    %v941 = vsel %vm702, %v940, %v932
    %v942 = vsel %vm704, %v941, %v935
    %v943 = vsel %vm706, %v942, %v937
    %v944 = vadd.f32 %v943, %v880
    %v945 = vmax.f32 %v944, 0.0
    %v946 = vsel %vm919, %v945, 0.0
    %947 = vst [vmem:[%s5] sm:$0xff] %v946
    %v950 = vrot.slane %v646, 1
    %v951 = vrot.slane %v647, 1
    %v952 = vsel %vm911, %v950, %v951
    %v955 = vmax.f32 %v646, %v952
    %v956 = vmax.f32 %v647, %v951
    %v957 = vrot.slane %v646, 2
    %v958 = vrot.slane %v647, 2
    %v959 = vsel %vm919, %v957, %v958
    %v962 = vmax.f32 %v955, %v959
    %v963 = vmax.f32 %v956, %v958
    %v965 = vrot.slane %v962, 1
    %v967 = vrot.slane %v962, 2
    %v969 = vrot.slane %v962, 3
    %v972 = vrot.slane %v963, 4
    %v974 = vrot.slane %v963, 5
    %v976 = vsel %vm698, %v962, %v965
    %v977 = vsel %vm700, %v976, %v967
    %v978 = vsel %vm702, %v977, %v969
    %v979 = vsel %vm704, %v978, %v972
    %v980 = vsel %vm706, %v979, %v974
    %v981 = vadd.f32 %v980, %v884
    %v982 = vmax.f32 %v981, 0.0
    %v983 = vsel %vm919, %v982, 0.0
    %984 = vst [vmem:[%s5 + $0x8] sm:$0xff] %v983
    %v987 = vrot.slane %v652, 1
    %v988 = vrot.slane %v653, 1
    %v989 = vsel %vm911, %v987, %v988
    %v992 = vmax.f32 %v652, %v989
    %v993 = vmax.f32 %v653, %v988
    %v994 = vrot.slane %v652, 2
    %v995 = vrot.slane %v653, 2
    %v996 = vsel %vm919, %v994, %v995
    %v999 = vmax.f32 %v992, %v996
    %v1000 = vmax.f32 %v993, %v995
    %v1002 = vrot.slane %v999, 1
    %v1004 = vrot.slane %v999, 2
    %v1006 = vrot.slane %v999, 3
    %v1009 = vrot.slane %v1000, 4
    %v1011 = vrot.slane %v1000, 5
    %v1013 = vsel %vm698, %v999, %v1002
    %v1014 = vsel %vm700, %v1013, %v1004
    %v1015 = vsel %vm702, %v1014, %v1006
    %v1016 = vsel %vm704, %v1015, %v1009
    %v1017 = vsel %vm706, %v1016, %v1011
    %v1018 = vadd.f32 %v1017, %v888
    %v1019 = vmax.f32 %v1018, 0.0
    %v1020 = vsel %vm919, %v1019, 0.0
    %1021 = vst [vmem:[%s5 + $0x10] sm:$0xff] %v1020
    %v1024 = vrot.slane %v658, 1
    %v1025 = vrot.slane %v659, 1
    %v1026 = vsel %vm911, %v1024, %v1025
    %v1029 = vmax.f32 %v658, %v1026
    %v1030 = vmax.f32 %v659, %v1025
    %v1031 = vrot.slane %v658, 2
    %v1032 = vrot.slane %v659, 2
    %v1033 = vsel %vm919, %v1031, %v1032
    %v1036 = vmax.f32 %v1029, %v1033
    %v1037 = vmax.f32 %v1030, %v1032
    %v1039 = vrot.slane %v1036, 1
    %v1041 = vrot.slane %v1036, 2
    %v1043 = vrot.slane %v1036, 3
    %v1046 = vrot.slane %v1037, 4
    %v1048 = vrot.slane %v1037, 5
    %v1050 = vsel %vm698, %v1036, %v1039
    %v1051 = vsel %vm700, %v1050, %v1041
    %v1052 = vsel %vm702, %v1051, %v1043
    %v1053 = vsel %vm704, %v1052, %v1046
    %v1054 = vsel %vm706, %v1053, %v1048
    %v1055 = vadd.f32 %v1054, %v892
    %v1056 = vmax.f32 %v1055, 0.0
    %v1057 = vsel %vm919, %v1056, 0.0
    %1058 = vst [vmem:[%s5 + $0x18] sm:$0xff] %v1057
    %v1061 = vrot.slane %v664, 1
    %v1062 = vrot.slane %v665, 1
    %v1063 = vsel %vm911, %v1061, %v1062
    %v1066 = vmax.f32 %v664, %v1063
    %v1067 = vmax.f32 %v665, %v1062
    %v1068 = vrot.slane %v664, 2
    %v1069 = vrot.slane %v665, 2
    %v1070 = vsel %vm919, %v1068, %v1069
    %v1073 = vmax.f32 %v1066, %v1070
    %v1074 = vmax.f32 %v1067, %v1069
    %v1076 = vrot.slane %v1073, 1
    %v1078 = vrot.slane %v1073, 2
    %v1080 = vrot.slane %v1073, 3
    %v1083 = vrot.slane %v1074, 4
    %v1085 = vrot.slane %v1074, 5
    %v1087 = vsel %vm698, %v1073, %v1076
    %v1088 = vsel %vm700, %v1087, %v1078
    %v1089 = vsel %vm702, %v1088, %v1080
    %v1090 = vsel %vm704, %v1089, %v1083
    %v1091 = vsel %vm706, %v1090, %v1085
    %v1092 = vadd.f32 %v1091, %v896
    %v1093 = vmax.f32 %v1092, 0.0
    %v1094 = vsel %vm919, %v1093, 0.0
    %1095 = vst [vmem:[%s5 + $0x20] sm:$0xff] %v1094
    %v1098 = vrot.slane %v670, 1
    %v1099 = vrot.slane %v671, 1
    %v1100 = vsel %vm911, %v1098, %v1099
    %v1103 = vmax.f32 %v670, %v1100
    %v1104 = vmax.f32 %v671, %v1099
    %v1105 = vrot.slane %v670, 2
    %v1106 = vrot.slane %v671, 2
    %v1107 = vsel %vm919, %v1105, %v1106
    %v1110 = vmax.f32 %v1103, %v1107
    %v1111 = vmax.f32 %v1104, %v1106
    %v1113 = vrot.slane %v1110, 1
    %v1115 = vrot.slane %v1110, 2
    %v1117 = vrot.slane %v1110, 3
    %v1120 = vrot.slane %v1111, 4
    %v1122 = vrot.slane %v1111, 5
    %v1124 = vsel %vm698, %v1110, %v1113
    %v1125 = vsel %vm700, %v1124, %v1115
    %v1126 = vsel %vm702, %v1125, %v1117
    %v1127 = vsel %vm704, %v1126, %v1120
    %v1128 = vsel %vm706, %v1127, %v1122
    %v1129 = vadd.f32 %v1128, %v900
    %v1130 = vmax.f32 %v1129, 0.0
    %v1131 = vsel %vm919, %v1130, 0.0
    %1132 = vst [vmem:[%s5 + $0x28] sm:$0xff] %v1131
    %v1135 = vrot.slane %v676, 1
    %v1136 = vrot.slane %v677, 1
    %v1137 = vsel %vm911, %v1135, %v1136
    %v1140 = vmax.f32 %v676, %v1137
    %v1141 = vmax.f32 %v677, %v1136
    %v1142 = vrot.slane %v676, 2
    %v1143 = vrot.slane %v677, 2
    %v1144 = vsel %vm919, %v1142, %v1143
    %v1147 = vmax.f32 %v1140, %v1144
    %v1148 = vmax.f32 %v1141, %v1143
    %v1150 = vrot.slane %v1147, 1
    %v1152 = vrot.slane %v1147, 2
    %v1154 = vrot.slane %v1147, 3
    %v1157 = vrot.slane %v1148, 4
    %v1159 = vrot.slane %v1148, 5
    %v1161 = vsel %vm698, %v1147, %v1150
    %v1162 = vsel %vm700, %v1161, %v1152
    %v1163 = vsel %vm702, %v1162, %v1154
    %v1164 = vsel %vm704, %v1163, %v1157
    %v1165 = vsel %vm706, %v1164, %v1159
    %v1166 = vadd.f32 %v1165, %v904
    %v1167 = vmax.f32 %v1166, 0.0
    %v1168 = vsel %vm919, %v1167, 0.0
    %1169 = vst [vmem:[%s5 + $0x30] sm:$0xff] %v1168
    %v1172 = vrot.slane %v682, 1
    %v1173 = vrot.slane %v683, 1
    %v1174 = vsel %vm911, %v1172, %v1173
    %v1177 = vmax.f32 %v682, %v1174
    %v1178 = vmax.f32 %v683, %v1173
    %v1179 = vrot.slane %v682, 2
    %v1180 = vrot.slane %v683, 2
    %v1181 = vsel %vm919, %v1179, %v1180
    %v1184 = vmax.f32 %v1177, %v1181
    %v1185 = vmax.f32 %v1178, %v1180
    %v1187 = vrot.slane %v1184, 1
    %v1189 = vrot.slane %v1184, 2
    %v1191 = vrot.slane %v1184, 3
    %v1194 = vrot.slane %v1185, 4
    %v1196 = vrot.slane %v1185, 5
    %v1198 = vsel %vm698, %v1184, %v1187
    %v1199 = vsel %vm700, %v1198, %v1189
    %v1200 = vsel %vm702, %v1199, %v1191
    %v1201 = vsel %vm704, %v1200, %v1194
    %v1202 = vsel %vm706, %v1201, %v1196
    %v1203 = vadd.f32 %v1202, %v908
    %v1204 = vmax.f32 %v1203, 0.0
    %v1205 = vsel %vm919, %v1204, 0.0
    %1206 = vst [vmem:[%s5 + $0x38] sm:$0xff] %v1205
    // Predicated region
    $region38: #{layer_block_forward.1} parent=1 // pred_check
      _
    $region39: #{layer_block_forward.1} parent=1 // pred_check_branch
      %1208 = sbr.rel (0) target = $region41
    $region40: #{layer_block_forward.1} parent=1 // pred_region
      _
    $region41: #{layer_block_forward.1} parent=1 // pred_fallthru
      _
    // Predicated region
    $region42: #{layer_block_forward.1} parent=1 // pred_check
      _
    $region43: #{layer_block_forward.1} parent=1 // pred_check_branch
      %1210 = sbr.rel (0) target = $region45
    $region44: #{layer_block_forward.1} parent=1 // pred_region
      _
    $region45: #{layer_block_forward.1} parent=1 // pred_fallthru
      _
    %1211 = vsyncpa [#allocation3], 1
    %1212 = vsyncpa [#allocation5], 1
    %1213 = vsyncpa [#allocation8], 1

</llo_original>
